<compile_context>
chip_gen: v6e
topology: v6e:2x2x1
jax: 0.10.0
libtpu: 0.0.40
codegen_flags: <defaults>
</compile_context>

<pallas_src>
import functools

import jax
import jax.numpy as jnp
from jax.experimental import pallas as pl
from jax.experimental.pallas import tpu as pltpu


def _round_up(a, b):
    return ((a + b - 1) // b) * b


@functools.lru_cache(maxsize=1)
def _vmem_limit_bytes():
    """Generation-aware VMEM request: physical capacity minus headroom.

    v7x has 64 MiB per TensorCore (-> ~52 MiB request), v5e/v6e have 128 MiB
    (-> capped at 100 MiB).  Falls back to a conservative 48 MiB if the
    hardware query is unavailable.
    """
    try:
        cap = int(pltpu.get_tpu_info().vmem_capacity_bytes)
    except Exception:
        return 48 * 1024 * 1024
    headroom = 12 * 1024 * 1024
    return int(max(32 * 1024 * 1024, min(cap - headroom, 100 * 1024 * 1024)))


def _pick_f_tile(F, max_f_block):
    """Largest multiple-of-128 divisor of F that is <= max_f_block (else F)."""
    if F <= max_f_block:
        return F
    tf = (max_f_block // 128) * 128
    while tf >= 128:
        if F % tf == 0:
            return tf
        tf -= 128
    return F


# ------------------------------ router kernel -------------------------------
def _router_kernel(x_ref, wr_ref, br_ref, pmax_ref, routes_ref):
    # logits: (TR, Ep); padded expert columns carry a -1e30 bias so they never
    # win the max and contribute 0 to sumexp.
    logits = jnp.dot(x_ref[...], wr_ref[...], preferred_element_type=jnp.float32)
    logits = logits + br_ref[...]
    lt = logits.T                                       # (Ep, TR) lane-dense tokens
    ep, tr = lt.shape
    m = jnp.max(lt, axis=0, keepdims=True)              # (1, TR)
    sumexp = jnp.sum(jnp.exp(lt - m), axis=0, keepdims=True)
    # max softmax prob == exp(m - m) / sumexp == 1 / sumexp
    pmax_ref[...] = (1.0 / sumexp).reshape(1, 1, tr)
    iota = jax.lax.broadcasted_iota(jnp.int32, lt.shape, 0).astype(jnp.float32)
    # first index achieving the max (matches torch.max tie-breaking)
    routes_f = jnp.min(jnp.where(lt == m, iota, float(ep)), axis=0, keepdims=True)
    routes_ref[...] = routes_f.astype(jnp.int32).reshape(1, 1, tr)


# --------------------- grouped-GEMM expert FFN kernel -----------------------
def _expert_ffn_kernel(te_ref, tv_ref, x_ref, pmax_ref, w1_ref, b1_ref,
                       w2_ref, b2_ref, out_ref, acc_ref):
    # te_ref (tile -> expert id) is only consumed by the index_maps.
    del te_ref
    t = pl.program_id(0)
    f = pl.program_id(1)

    @pl.when(f == 0)
    def _():
        acc_ref[...] = jnp.zeros_like(acc_ref)

    # Skip the FLOPs for fully-padded tiles (their outputs are never read).
    @pl.when(tv_ref[t] > 0)
    def _():
        h = jnp.dot(x_ref[...], w1_ref[0], preferred_element_type=jnp.float32)
        h = jnp.maximum(h + b1_ref[0], 0.0)                      # ReLU, f32
        acc_ref[...] += jnp.dot(h.astype(w2_ref.dtype), w2_ref[0],
                                preferred_element_type=jnp.float32)

    @pl.when(f == pl.num_programs(1) - 1)
    def _():
        y = acc_ref[...] + b2_ref[0]
        out_ref[...] = (y * pmax_ref[...]).astype(out_ref.dtype)


# --------------------------------- wrapper ----------------------------------
@functools.partial(
    jax.jit,
    static_argnames=("block_tokens", "router_block_tokens", "f_block",
                     "compute_dtype"))
def switch_feed_forward(x, params, *, block_tokens=256,
                        router_block_tokens=512, f_block=2048,
                        compute_dtype=None):
    wr, br, w1, b1, w2, b2 = params
    B, S, D = x.shape
    N = B * S
    E = wr.shape[1]
    F = w1.shape[2]
    xf = x.reshape(N, D)
    if compute_dtype is None:
        compute_dtype = jnp.bfloat16       # MXU-native; f32 accumulation below
    vmem_limit = _vmem_limit_bytes()

    # ------------------------------ router -----------------------------------
    # MXU/lane-aligned router tile (multiple of 128, clamped to padded N).
    TR = min(_round_up(max(router_block_tokens, 1), 128), _round_up(N, 128))
    Nr = _round_up(N, TR)
    Ep = _round_up(E, 128)                 # pad experts to full lane width
    x_r = xf.astype(jnp.float32)           # router always in f32 (exact routing)
    if Nr != N:
        x_r = jnp.concatenate([x_r, jnp.zeros((Nr - N, D), jnp.float32)], axis=0)
    wr_p = jnp.zeros((D, Ep), jnp.float32).at[:, :E].set(wr.astype(jnp.float32))
    br_p = jnp.full((1, Ep), -1e30, jnp.float32).at[0, :E].set(
        br.astype(jnp.float32))

    n_r_tiles = Nr // TR
    pmax_rows, routes_rows = pl.pallas_call(
        _router_kernel,
        out_shape=(jax.ShapeDtypeStruct((n_r_tiles, 1, TR), jnp.float32),
                   jax.ShapeDtypeStruct((n_r_tiles, 1, TR), jnp.int32)),
        grid=(n_r_tiles,),
        in_specs=[pl.BlockSpec((TR, D), lambda i: (i, 0)),
                  pl.BlockSpec((D, Ep), lambda i: (0, 0)),
                  pl.BlockSpec((1, Ep), lambda i: (0, 0))],
        out_specs=(pl.BlockSpec((1, 1, TR), lambda i: (i, 0, 0)),
                   pl.BlockSpec((1, 1, TR), lambda i: (i, 0, 0))),
        compiler_params=pltpu.CompilerParams(
            dimension_semantics=("parallel",),
            vmem_limit_bytes=vmem_limit),
    )(x_r, wr_p, br_p)
    pmax = pmax_rows.reshape(-1)[:N]        # (N,) f32
    routes = routes_rows.reshape(-1)[:N]    # (N,) i32

    # -------- sort tokens by expert, pad each group to TM (XLA side) ---------
    # MXU-aligned token tile (multiple of 256, clamped to padded N).
    TM = min(_round_up(max(block_tokens, 1), 256), _round_up(N, 256))
    num_token_tiles = pl.cdiv(N, TM)
    num_tiles = num_token_tiles + E       # static bound: each group adds <= 1 pad tile
    P = num_tiles * TM

    counts = jnp.bincount(routes, length=E).astype(jnp.int32)      # (E,)
    group_start = jnp.cumsum(counts) - counts
    padded_counts = ((counts + TM - 1) // TM) * TM
    padded_end = jnp.cumsum(padded_counts)
    padded_start = padded_end - padded_counts

    order = jnp.argsort(routes).astype(jnp.int32)                  # tokens sorted by expert
    sorted_routes = routes[order]
    rank = jnp.arange(N, dtype=jnp.int32) - group_start[sorted_routes]
    padded_pos = (padded_start[sorted_routes] + rank).astype(jnp.int32)

    # gather_src[p] = source token of padded slot p (index N -> zero-pad row).
    # TODO(synk): fold this gather (and the final un-sort) into the expert
    #             kernel via per-row DMA gather/scatter to cut the extra (P,D)
    #             HBM round trips; kept in XLA here for robustness.
    gather_src = jnp.full((P,), N, dtype=jnp.int32).at[padded_pos].set(order)
    x_pad = jnp.concatenate([xf, jnp.zeros((1, D), xf.dtype)], axis=0)
    x_sorted = x_pad[gather_src].astype(compute_dtype)             # (P, D)
    pmax_pad = jnp.concatenate([pmax, jnp.zeros((1,), pmax.dtype)])
    pmax_sorted = pmax_pad[gather_src][:, None]                    # (P, 1) f32

    tile_start = jnp.arange(num_tiles, dtype=jnp.int32) * TM
    tile_expert = jnp.minimum(
        jnp.searchsorted(padded_end, tile_start, side="right"),
        E - 1).astype(jnp.int32)                                   # (num_tiles,)
    group_real_end = padded_start + counts                         # (E,)
    tile_valid = (tile_start < group_real_end[tile_expert]).astype(jnp.int32)

    # ------------------ expert grouped GEMM (F-split reduction) --------------
    TF = _pick_f_tile(F, f_block)
    num_f_tiles = F // TF

    w1_c = w1.astype(compute_dtype)
    w2_c = w2.astype(compute_dtype)
    b1_r = b1.reshape(E, 1, F).astype(jnp.float32)
    b2_r = b2.reshape(E, 1, D).astype(jnp.float32)

    # Note: with the inner F axis the weight block changes every step, so
    # double-buffering (default) is the right choice; TF bounds the weight
    # working set instead of pl.Buffered(1) (kept default for robust lowering).
    out_sorted = pl.pallas_call(
        _expert_ffn_kernel,
        out_shape=jax.ShapeDtypeStruct((P, D), x.dtype),
        grid_spec=pltpu.PrefetchScalarGridSpec(
            num_scalar_prefetch=2,
            grid=(num_tiles, num_f_tiles),
            in_specs=[
                pl.BlockSpec((TM, D), lambda t, f, te, tv: (t, 0)),          # tokens
                pl.BlockSpec((TM, 1), lambda t, f, te, tv: (t, 0)),          # route_prob_max
                pl.BlockSpec((1, D, TF), lambda t, f, te, tv: (te[t], 0, f)),  # W1[e]
                pl.BlockSpec((1, 1, TF), lambda t, f, te, tv: (te[t], 0, f)),  # b1[e]
                pl.BlockSpec((1, TF, D), lambda t, f, te, tv: (te[t], f, 0)),  # W2[e]
                pl.BlockSpec((1, 1, D), lambda t, f, te, tv: (te[t], 0, 0)),   # b2[e]
            ],
            out_specs=pl.BlockSpec((TM, D), lambda t, f, te, tv: (t, 0)),
            scratch_shapes=[pltpu.VMEM((TM, D), jnp.float32)],               # y accumulator
        ),
        compiler_params=pltpu.CompilerParams(
            dimension_semantics=("parallel", "arbitrary"),
            vmem_limit_bytes=vmem_limit,
        ),
    )(tile_expert, tile_valid, x_sorted, pmax_sorted, w1_c, b1_r, w2_c, b2_r)

    # Un-sort: token order[i] lives at padded slot padded_pos[i].
    inv_pos = jnp.zeros((N,), jnp.int32).at[order].set(padded_pos)
    out = out_sorted[inv_pos]                                      # (N, D)
    return out.reshape(B, S, D)


# ---------------------------- pure-JAX reference -----------------------------
def reference(x, params):
    wr, br, w1, b1, w2, b2 = params
    B, S, D = x.shape
    xf = x.reshape(-1, D)
    logits = xf @ wr + br
    probs = jax.nn.softmax(logits, axis=-1)
    pmax = probs.max(axis=-1)
    routes = probs.argmax(axis=-1)
    h = jnp.einsum('nd,edf->enf', xf, w1) + b1[:, None, :]
    h = jnp.maximum(h, 0.0)
    y = jnp.einsum('enf,efd->end', h, w2) + b2[:, None, :]
    sel = y[routes, jnp.arange(xf.shape[0])]
    out = sel * pmax[:, None]
    return out.reshape(B, S, D)


if __name__ == "__main__":
    B, S, D, F, E = 2, 8, 32, 64, 4   # batch, seq, hidden, ffn, num_experts
    key = jax.random.PRNGKey(0)
    ks = jax.random.split(key, 7)
    x = jax.random.normal(ks[0], (B, S, D), jnp.float32)
    wr = jax.random.normal(ks[1], (D, E), jnp.float32) * 0.02
    br = jax.random.normal(ks[2], (E,), jnp.float32) * 0.02
    w1 = jax.random.normal(ks[3], (E, D, F), jnp.float32) * 0.02
    b1 = jax.random.normal(ks[4], (E, F), jnp.float32) * 0.02
    w2 = jax.random.normal(ks[5], (E, F, D), jnp.float32) * 0.02
    b2 = jax.random.normal(ks[6], (E, D), jnp.float32) * 0.02
    params = (wr, br, w1, b1, w2, b2)

    ref = reference(x, params)

    # f32 compute path (tight check vs reference).
    out_f32 = switch_feed_forward(x, params, compute_dtype=jnp.float32)
    jax.block_until_ready(out_f32)
    assert out_f32.shape == (B, S, D)
    assert jnp.allclose(out_f32, ref, atol=2e-4, rtol=2e-3), "f32 mismatch vs reference"

    # Default path: bf16 MXU matmuls with f32 accumulation (looser tolerance).
    out_bf16 = switch_feed_forward(x, params)
    jax.block_until_ready(out_bf16)
    assert jnp.allclose(out_bf16, ref, atol=5e-3, rtol=5e-2), "bf16 mismatch vs reference"

    print("KERNEL_OK")
</pallas_src>

<mosaic_0001>
module attributes {stable_mosaic.version = 11 : i64} {
  func.func private @main(%arg0: i32) attributes {dimension_semantics = [#tpu.dimension_semantics<core_parallel>], iteration_bounds = array<i64: 2>, tpu.core_type = #tpu.core_type<sc_scalar_subcore>, window_params = []} {
    return
  }
}

module attributes {stable_mosaic.version = 11 : i64} {
  func.func private @main(%arg0: i32) attributes {dimension_semantics = [#tpu.dimension_semantics<core_parallel>], iteration_bounds = array<i64: 2>, tpu.core_type = #tpu.core_type<sc_scalar_subcore>, window_params = []} {
    return
  }
}

module attributes {stable_mosaic.version = 11 : i64} {
  func.func @_router_kernel(%arg0: i32, %arg1: memref<128x32xf32, #tpu.memory_space<vmem>>, %arg2: memref<32x128xf32, #tpu.memory_space<vmem>>, %arg3: memref<1x128xf32, #tpu.memory_space<vmem>>, %arg4: memref<1x1x128xf32, #tpu.memory_space<vmem>>, %arg5: memref<1x1x128xi32, #tpu.memory_space<vmem>>) attributes {dimension_semantics = [#tpu.dimension_semantics<parallel>], iteration_bounds = array<i64: 1>, scalar_prefetch = 0 : i64, scratch_operands = 0 : i64, tpu.core_type = #tpu.core_type<tc>, window_params = [{transform_indices = @transform_0, window_bounds = array<i64: 128, 32>}, {pipeline_mode = #tpu.pipeline_mode<synchronous>, transform_indices = @transform_1, window_bounds = array<i64: 32, 128>}, {pipeline_mode = #tpu.pipeline_mode<synchronous>, transform_indices = @transform_2, window_bounds = array<i64: 1, 128>}, {transform_indices = @transform_3, window_bounds = array<i64: 1, 1, 128>}, {transform_indices = @transform_4, window_bounds = array<i64: 1, 1, 128>}]} {
    %c0 = arith.constant 0 : index
    %c0_0 = arith.constant 0 : index
    %0 = vector.load %arg1[%c0, %c0_0] : memref<128x32xf32, #tpu.memory_space<vmem>>, vector<128x32xf32>
    %c0_1 = arith.constant 0 : index
    %c0_2 = arith.constant 0 : index
    %1 = vector.load %arg2[%c0_1, %c0_2] : memref<32x128xf32, #tpu.memory_space<vmem>>, vector<32x128xf32>
    %cst = arith.constant dense<0.000000e+00> : vector<128x128xf32>
    %2 = tpu.matmul %0, %1, %cst {dimension_numbers = #tpu.dot_dimension_numbers<[1], [0], [0], [1], [0, 0, 1, 1], [], []>} : vector<128x32xf32>, vector<32x128xf32>, vector<128x128xf32> -> vector<128x128xf32>
    %c0_3 = arith.constant 0 : index
    %c0_4 = arith.constant 0 : index
    %3 = vector.load %arg3[%c0_3, %c0_4] : memref<1x128xf32, #tpu.memory_space<vmem>>, vector<1x128xf32>
    %4 = vector.broadcast %3 : vector<1x128xf32> to vector<128x128xf32>
    %5 = arith.addf %2, %4 : vector<128x128xf32>
    %6 = tpu.transpose %5, [1, 0] : vector<128x128xf32> -> vector<128x128xf32>
    %cst_5 = arith.constant dense<0xFF800000> : vector<128xf32>
    %7 = vector.multi_reduction <maximumf>, %6, %cst_5 [0] : vector<128x128xf32> to vector<128xf32>
    %8 = vector.shape_cast %7 : vector<128xf32> to vector<1x128xf32>
    %9 = vector.broadcast %8 : vector<1x128xf32> to vector<128x128xf32>
    %10 = arith.subf %6, %9 : vector<128x128xf32>
    %11 = math.exp %10 : vector<128x128xf32>
    %cst_6 = arith.constant dense<0.000000e+00> : vector<128xf32>
    %12 = vector.multi_reduction <add>, %11, %cst_6 [0] : vector<128x128xf32> to vector<128xf32>
    %13 = vector.shape_cast %12 : vector<128xf32> to vector<1x128xf32>
    %cst_7 = arith.constant 1.000000e+00 : f32
    %14 = vector.broadcast %cst_7 : f32 to vector<1x128xf32>
    %15 = arith.divf %14, %13 : vector<1x128xf32>
    %16 = vector.shape_cast %15 : vector<1x128xf32> to vector<1x1x128xf32>
    %c0_8 = arith.constant 0 : index
    %c0_9 = arith.constant 0 : index
    %c0_10 = arith.constant 0 : index
    %17 = vector.load %arg4[%c0_8, %c0_9, %c0_10] : memref<1x1x128xf32, #tpu.memory_space<vmem>>, vector<1x1x128xf32>
    tpu.vector_store %arg4[%c0_8, %c0_9, %c0_10], %16 {strides = array<i32>} : memref<1x1x128xf32, #tpu.memory_space<vmem>>, vector<1x1x128xf32>,
    %18 = tpu.iota {dimensions = array<i32: 0>} : vector<128x128xi32>
    %19 = arith.sitofp %18 : vector<128x128xi32> to vector<128x128xf32>
    %20 = vector.broadcast %8 : vector<1x128xf32> to vector<128x128xf32>
    %21 = arith.cmpf oeq, %6, %20 : vector<128x128xf32>
    %cst_11 = arith.constant 1.280000e+02 : f32
    %22 = vector.broadcast %cst_11 : f32 to vector<128x128xf32>
    %23 = arith.select %21, %19, %22 : vector<128x128xi1>, vector<128x128xf32>
    %cst_12 = arith.constant dense<0x7F800000> : vector<128xf32>
    %24 = vector.multi_reduction <minimumf>, %23, %cst_12 [0] : vector<128x128xf32> to vector<128xf32>
    %25 = vector.shape_cast %24 : vector<128xf32> to vector<1x128xf32>
    %26 = arith.fptosi %25 : vector<1x128xf32> to vector<1x128xi32>
    %27 = vector.shape_cast %26 : vector<1x128xi32> to vector<1x1x128xi32>
    %c0_13 = arith.constant 0 : index
    %c0_14 = arith.constant 0 : index
    %c0_15 = arith.constant 0 : index
    %28 = vector.load %arg5[%c0_13, %c0_14, %c0_15] : memref<1x1x128xi32, #tpu.memory_space<vmem>>, vector<1x1x128xi32>
    tpu.vector_store %arg5[%c0_13, %c0_14, %c0_15], %27 {strides = array<i32>} : memref<1x1x128xi32, #tpu.memory_space<vmem>>, vector<1x1x128xi32>,
    return
  }
  func.func @transform_0(%arg0: i32) -> (i32, i32) {
    %c0_i32 = arith.constant 0 : i32
    %c0_i32_0 = arith.constant 0 : i32
    return %arg0, %c0_i32 : i32, i32
  }
  func.func @transform_1(%arg0: i32) -> (i32, i32) {
    %c0_i32 = arith.constant 0 : i32
    %c0_i32_0 = arith.constant 0 : i32
    %c0_i32_1 = arith.constant 0 : i32
    return %c0_i32, %c0_i32_0 : i32, i32
  }
  func.func @transform_2(%arg0: i32) -> (i32, i32) {
    %c0_i32 = arith.constant 0 : i32
    %c0_i32_0 = arith.constant 0 : i32
    %c0_i32_1 = arith.constant 0 : i32
    return %c0_i32, %c0_i32_0 : i32, i32
  }
  func.func @transform_3(%arg0: i32) -> (i32, i32, i32) {
    %c0_i32 = arith.constant 0 : i32
    %c0_i32_0 = arith.constant 0 : i32
    %c0_i32_1 = arith.constant 0 : i32
    return %arg0, %c0_i32, %c0_i32_0 : i32, i32, i32
  }
  func.func @transform_4(%arg0: i32) -> (i32, i32, i32) {
    %c0_i32 = arith.constant 0 : i32
    %c0_i32_0 = arith.constant 0 : i32
    %c0_i32_1 = arith.constant 0 : i32
    return %arg0, %c0_i32, %c0_i32_0 : i32, i32, i32
  }
}

module attributes {stable_mosaic.version = 11 : i64} {
  func.func @_expert_ffn_kernel(%arg0: i32, %arg1: i32, %arg2: memref<5xi32, #tpu.memory_space<smem>>, %arg3: memref<5xi32, #tpu.memory_space<smem>>, %arg4: memref<256x32xf32, #tpu.memory_space<vmem>>, %arg5: memref<256x1xf32, #tpu.memory_space<vmem>>, %arg6: memref<1x32x64xf32, #tpu.memory_space<vmem>>, %arg7: memref<1x1x64xf32, #tpu.memory_space<vmem>>, %arg8: memref<1x64x32xf32, #tpu.memory_space<vmem>>, %arg9: memref<1x1x32xf32, #tpu.memory_space<vmem>>, %arg10: memref<256x32xf32, #tpu.memory_space<vmem>>, %arg11: memref<256x32xf32, #tpu.memory_space<vmem>>) attributes {dimension_semantics = [#tpu.dimension_semantics<parallel>, #tpu.dimension_semantics<arbitrary>], iteration_bounds = array<i64: 5, 1>, scalar_prefetch = 2 : i64, scratch_operands = 1 : i64, tpu.core_type = #tpu.core_type<tc>, window_params = [{transform_indices = @transform_0, window_bounds = array<i64: 256, 32>}, {transform_indices = @transform_1, window_bounds = array<i64: 256, 1>}, {transform_indices = @transform_2, window_bounds = array<i64: 1, 32, 64>}, {transform_indices = @transform_3, window_bounds = array<i64: 1, 1, 64>}, {transform_indices = @transform_4, window_bounds = array<i64: 1, 64, 32>}, {transform_indices = @transform_5, window_bounds = array<i64: 1, 1, 32>}, {transform_indices = @transform_6, window_bounds = array<i64: 256, 32>}]} {
    %c0_i32 = arith.constant 0 : i32
    %0 = arith.cmpi eq, %arg1, %c0_i32 : i32
    %1 = arith.extui %0 : i1 to i32
    %c0_i32_0 = arith.constant 0 : i32
    %2 = arith.cmpi ne, %1, %c0_i32_0 : i32
    scf.if %2 {
      %cst = arith.constant 0.000000e+00 : f32
      %11 = vector.broadcast %cst : f32 to vector<256x32xf32>
      %c0 = arith.constant 0 : index
      %c0_5 = arith.constant 0 : index
      %12 = vector.load %arg11[%c0, %c0_5] : memref<256x32xf32, #tpu.memory_space<vmem>>, vector<256x32xf32>
      tpu.vector_store %arg11[%c0, %c0_5], %11 {strides = array<i32>} : memref<256x32xf32, #tpu.memory_space<vmem>>, vector<256x32xf32>,
    } else {
    }
    %3 = arith.index_cast %arg0 : i32 to index
    %4 = memref.load %arg3[%3] : memref<5xi32, #tpu.memory_space<smem>>
    %c0_i32_1 = arith.constant 0 : i32
    %5 = arith.cmpi sgt, %4, %c0_i32_1 : i32
    %6 = arith.extui %5 : i1 to i32
    %c0_i32_2 = arith.constant 0 : i32
    %7 = arith.cmpi ne, %6, %c0_i32_2 : i32
    scf.if %7 {
      %c0 = arith.constant 0 : index
      %c0_5 = arith.constant 0 : index
      %11 = vector.load %arg4[%c0, %c0_5] : memref<256x32xf32, #tpu.memory_space<vmem>>, vector<256x32xf32>
      %c0_6 = arith.constant 0 : index
      %c0_7 = arith.constant 0 : index
      %c0_8 = arith.constant 0 : index
      %12 = vector.load %arg6[%c0_6, %c0_7, %c0_8] : memref<1x32x64xf32, #tpu.memory_space<vmem>>, vector<1x32x64xf32>
      %13 = vector.shape_cast %12 : vector<1x32x64xf32> to vector<32x64xf32>
      %cst = arith.constant dense<0.000000e+00> : vector<256x64xf32>
      %14 = tpu.matmul %11, %13, %cst {dimension_numbers = #tpu.dot_dimension_numbers<[1], [0], [0], [1], [0, 0, 1, 1], [], []>} : vector<256x32xf32>, vector<32x64xf32>, vector<256x64xf32> -> vector<256x64xf32>
      %c0_9 = arith.constant 0 : index
      %c0_10 = arith.constant 0 : index
      %c0_11 = arith.constant 0 : index
      %15 = vector.load %arg7[%c0_9, %c0_10, %c0_11] : memref<1x1x64xf32, #tpu.memory_space<vmem>>, vector<1x1x64xf32>
      %16 = vector.shape_cast %15 : vector<1x1x64xf32> to vector<1x64xf32>
      %17 = vector.broadcast %16 : vector<1x64xf32> to vector<256x64xf32>
      %18 = arith.addf %14, %17 : vector<256x64xf32>
      %cst_12 = arith.constant 0.000000e+00 : f32
      %19 = vector.broadcast %cst_12 : f32 to vector<256x64xf32>
      %20 = arith.maximumf %18, %19 : vector<256x64xf32>
      %c0_13 = arith.constant 0 : index
      %c0_14 = arith.constant 0 : index
      %21 = vector.load %arg11[%c0_13, %c0_14] : memref<256x32xf32, #tpu.memory_space<vmem>>, vector<256x32xf32>
      %c0_15 = arith.constant 0 : index
      %c0_16 = arith.constant 0 : index
      %c0_17 = arith.constant 0 : index
      %22 = vector.load %arg8[%c0_15, %c0_16, %c0_17] : memref<1x64x32xf32, #tpu.memory_space<vmem>>, vector<1x64x32xf32>
      %23 = vector.shape_cast %22 : vector<1x64x32xf32> to vector<64x32xf32>
      %cst_18 = arith.constant dense<0.000000e+00> : vector<256x32xf32>
      %24 = tpu.matmul %20, %23, %cst_18 {dimension_numbers = #tpu.dot_dimension_numbers<[1], [0], [0], [1], [0, 0, 1, 1], [], []>} : vector<256x64xf32>, vector<64x32xf32>, vector<256x32xf32> -> vector<256x32xf32>
      %25 = arith.addf %21, %24 : vector<256x32xf32>
      %c0_19 = arith.constant 0 : index
      %c0_20 = arith.constant 0 : index
      %26 = vector.load %arg11[%c0_19, %c0_20] : memref<256x32xf32, #tpu.memory_space<vmem>>, vector<256x32xf32>
      tpu.vector_store %arg11[%c0_19, %c0_20], %25 {strides = array<i32>} : memref<256x32xf32, #tpu.memory_space<vmem>>, vector<256x32xf32>,
    } else {
    }
    %c0_i32_3 = arith.constant 0 : i32
    %8 = arith.cmpi eq, %arg1, %c0_i32_3 : i32
    %9 = arith.extui %8 : i1 to i32
    %c0_i32_4 = arith.constant 0 : i32
    %10 = arith.cmpi ne, %9, %c0_i32_4 : i32
    scf.if %10 {
      %c0 = arith.constant 0 : index
      %c0_5 = arith.constant 0 : index
      %11 = vector.load %arg11[%c0, %c0_5] : memref<256x32xf32, #tpu.memory_space<vmem>>, vector<256x32xf32>
      %c0_6 = arith.constant 0 : index
      %c0_7 = arith.constant 0 : index
      %c0_8 = arith.constant 0 : index
      %12 = vector.load %arg9[%c0_6, %c0_7, %c0_8] : memref<1x1x32xf32, #tpu.memory_space<vmem>>, vector<1x1x32xf32>
      %13 = vector.shape_cast %12 : vector<1x1x32xf32> to vector<1x32xf32>
      %14 = vector.broadcast %13 : vector<1x32xf32> to vector<256x32xf32>
      %15 = arith.addf %11, %14 : vector<256x32xf32>
      %c0_9 = arith.constant 0 : index
      %c0_10 = arith.constant 0 : index
      %16 = vector.load %arg5[%c0_9, %c0_10] : memref<256x1xf32, #tpu.memory_space<vmem>>, vector<256x1xf32>
      %17 = vector.broadcast %16 : vector<256x1xf32> to vector<256x32xf32>
      %18 = arith.mulf %15, %17 : vector<256x32xf32>
      %c0_11 = arith.constant 0 : index
      %c0_12 = arith.constant 0 : index
      %19 = vector.load %arg10[%c0_11, %c0_12] : memref<256x32xf32, #tpu.memory_space<vmem>>, vector<256x32xf32>
      tpu.vector_store %arg10[%c0_11, %c0_12], %18 {strides = array<i32>} : memref<256x32xf32, #tpu.memory_space<vmem>>, vector<256x32xf32>,
    } else {
    }
    return
  }
  func.func @transform_0(%arg0: i32, %arg1: i32, %arg2: memref<5xi32, #tpu.memory_space<smem>>, %arg3: memref<5xi32, #tpu.memory_space<smem>>) -> (i32, i32) {
    %c0_i32 = arith.constant 0 : i32
    %c0_i32_0 = arith.constant 0 : i32
    return %arg0, %c0_i32 : i32, i32
  }
  func.func @transform_1(%arg0: i32, %arg1: i32, %arg2: memref<5xi32, #tpu.memory_space<smem>>, %arg3: memref<5xi32, #tpu.memory_space<smem>>) -> (i32, i32) {
    %c0_i32 = arith.constant 0 : i32
    %c0_i32_0 = arith.constant 0 : i32
    return %arg0, %c0_i32 : i32, i32
  }
  func.func @transform_2(%arg0: i32, %arg1: i32, %arg2: memref<5xi32, #tpu.memory_space<smem>>, %arg3: memref<5xi32, #tpu.memory_space<smem>>) -> (i32, i32, i32) {
    %0 = arith.index_cast %arg0 : i32 to index
    %1 = memref.load %arg2[%0] : memref<5xi32, #tpu.memory_space<smem>>
    %c0_i32 = arith.constant 0 : i32
    %c0_i32_0 = arith.constant 0 : i32
    return %1, %c0_i32, %arg1 : i32, i32, i32
  }
  func.func @transform_3(%arg0: i32, %arg1: i32, %arg2: memref<5xi32, #tpu.memory_space<smem>>, %arg3: memref<5xi32, #tpu.memory_space<smem>>) -> (i32, i32, i32) {
    %0 = arith.index_cast %arg0 : i32 to index
    %1 = memref.load %arg2[%0] : memref<5xi32, #tpu.memory_space<smem>>
    %c0_i32 = arith.constant 0 : i32
    %c0_i32_0 = arith.constant 0 : i32
    return %1, %c0_i32, %arg1 : i32, i32, i32
  }
  func.func @transform_4(%arg0: i32, %arg1: i32, %arg2: memref<5xi32, #tpu.memory_space<smem>>, %arg3: memref<5xi32, #tpu.memory_space<smem>>) -> (i32, i32, i32) {
    %0 = arith.index_cast %arg0 : i32 to index
    %1 = memref.load %arg2[%0] : memref<5xi32, #tpu.memory_space<smem>>
    %c0_i32 = arith.constant 0 : i32
    %c0_i32_0 = arith.constant 0 : i32
    return %1, %arg1, %c0_i32 : i32, i32, i32
  }
  func.func @transform_5(%arg0: i32, %arg1: i32, %arg2: memref<5xi32, #tpu.memory_space<smem>>, %arg3: memref<5xi32, #tpu.memory_space<smem>>) -> (i32, i32, i32) {
    %0 = arith.index_cast %arg0 : i32 to index
    %1 = memref.load %arg2[%0] : memref<5xi32, #tpu.memory_space<smem>>
    %c0_i32 = arith.constant 0 : i32
    %c0_i32_0 = arith.constant 0 : i32
    %c0_i32_1 = arith.constant 0 : i32
    return %1, %c0_i32, %c0_i32_0 : i32, i32, i32
  }
  func.func @transform_6(%arg0: i32, %arg1: i32, %arg2: memref<5xi32, #tpu.memory_space<smem>>, %arg3: memref<5xi32, #tpu.memory_space<smem>>) -> (i32, i32) {
    %c0_i32 = arith.constant 0 : i32
    %c0_i32_0 = arith.constant 0 : i32
    return %arg0, %c0_i32 : i32, i32
  }
}

</mosaic_0001>

<llo_original>
// kernel: custom-call
$region0: #{custom-call}
  %s0 = inlined_call_operand.vmem [shape: u32[5], index: 0, kind: output, shape index: {}]

// kernel: switch_feed_forward.2
$region0: #{switch_feed_forward.2}
  #allocation0 [shape = 'u32[]', space=smem, size = 0x4, offset = 0x4, fixed_abs, tag = 'smem constant byte address 0x4 - core index']
  #allocation1 [shape = 'u32[144,128]{1,0:T(1,128)}', space=vmem, size = 0x12000, scoped, tag = 'internal scratch']
  %s0 = inlined_call_operand.vmem [shape: f32[128,32], index: 0, kind: input, shape index: {}]
  %s1 = inlined_call_operand.vmem [shape: f32[32,128], index: 1, kind: input, shape index: {}]
  %s2 = inlined_call_operand.vmem [shape: f32[1,128], index: 2, kind: input, shape index: {}]
  %s3 = inlined_call_operand.vmem [shape: f32[1,1,128], index: 3, kind: output, shape index: {0}]
  %s4 = inlined_call_operand.vmem [shape: s32[1,1,128], index: 4, kind: output, shape index: {1}]
  %5 = xla_tuple %s3, %s4
  %s6 = sld [smem:[#allocation0]]
  $region30: #{switch_feed_forward.2} parent=0
    _
  %s8 = ssub.s32 1, %s6
  %s9 = scalar_select 0, %s8, %s6
  // Predicated region
  $region2: #{switch_feed_forward.2} parent=0 // pred_check
    _
  $region3: #{switch_feed_forward.2} parent=0 // pred_check_branch
    %11 = sbr.rel (0) target = $region5
  $region4: #{switch_feed_forward.2} parent=0 // pred_region
    _
  $region5: #{switch_feed_forward.2} parent=0 // pred_fallthru
    _
  // Predicated region
  $region6: #{switch_feed_forward.2} parent=0 // pred_check
    _
  $region7: #{switch_feed_forward.2} parent=0 // pred_check_branch
    %13 = sbr.rel (0) target = $region9
  $region8: #{switch_feed_forward.2} parent=0 // pred_region
    _
  $region9: #{switch_feed_forward.2} parent=0 // pred_fallthru
    _
  // Predicated region
  $region10: #{switch_feed_forward.2} parent=0 // pred_check
    _
  $region11: #{switch_feed_forward.2} parent=0 // pred_check_branch
    %15 = sbr.rel (0) target = $region13
  $region12: #{switch_feed_forward.2} parent=0 // pred_region
    _
  $region13: #{switch_feed_forward.2} parent=0 // pred_fallthru
    _
  %v16 = vld [vmem:[%s0] sm:$0xff]
  %v17 = vld [vmem:[%s0 + $0x8] sm:$0xff]
  %v18 = vld [vmem:[%s0 + $0x10] sm:$0xff]
  %v19 = vld [vmem:[%s0 + $0x18] sm:$0xff]
  %v20 = vld [vmem:[%s0 + $0x20] sm:$0xff]
  %v21 = vld [vmem:[%s0 + $0x28] sm:$0xff]
  %v22 = vld [vmem:[%s0 + $0x30] sm:$0xff]
  %v23 = vld [vmem:[%s0 + $0x38] sm:$0xff]
  %v24 = vld [vmem:[%s0 + $0x40] sm:$0xff]
  %v25 = vld [vmem:[%s0 + $0x48] sm:$0xff]
  %v26 = vld [vmem:[%s0 + $0x50] sm:$0xff]
  %v27 = vld [vmem:[%s0 + $0x58] sm:$0xff]
  %v28 = vld [vmem:[%s0 + $0x60] sm:$0xff]
  %v29 = vld [vmem:[%s0 + $0x68] sm:$0xff]
  %v30 = vld [vmem:[%s0 + $0x70] sm:$0xff]
  %v31 = vld [vmem:[%s0 + $0x78] sm:$0xff]
  %v32 = vld [vmem:[%s1] sm:$0xff]
  %v33 = vld [vmem:[%s1 + $0x8] sm:$0xff]
  %v34 = vld [vmem:[%s1 + $0x10] sm:$0xff]
  %v35 = vld [vmem:[%s1 + $0x18] sm:$0xff]
  %v36 = vld [vmem:[%s2] sm:$0x1]
  %v38 = vlaneseq
  %v39 = vshrl.u32 %v38, 7
  %v40 = vsub.s32 0, %v39
  %v41 = vrot.slane %v36, %v40
  %vm43 = vcmask 261120
  %v45 = vsel %vm43, %v16, 0
  %v48 = vsel %vm43, %v17, 0
  %v51 = vsel %vm43, %v18, 0
  %v54 = vsel %vm43, %v19, 0
  %v57 = vsel %vm43, %v20, 0
  %v60 = vsel %vm43, %v21, 0
  %v63 = vsel %vm43, %v22, 0
  %v66 = vsel %vm43, %v23, 0
  %v69 = vsel %vm43, %v24, 0
  %v72 = vsel %vm43, %v25, 0
  %v75 = vsel %vm43, %v26, 0
  %v78 = vsel %vm43, %v27, 0
  %v81 = vsel %vm43, %v28, 0
  %v84 = vsel %vm43, %v29, 0
  %v87 = vsel %vm43, %v30, 0
  %v90 = vsel %vm43, %v31, 0
  %92 = vmatprep.subr.mxu0 0.0
  %93 = vmatpush1.msra.mxu0 0.0
  %94 = vmatprep.subr.mxu0 0.0
  %95 = vmatpush1.msra.mxu0 0.0
  %96 = vmatprep.subr.mxu0 0.0
  %97 = vmatpush1.msra.mxu0 0.0
  %98 = vmatprep.subr.mxu0 0.0
  %99 = vmatpush1.msra.mxu0 0.0
  %100 = vmatprep.subr.mxu0 0.0
  %101 = vmatpush1.msra.mxu0 0.0
  %102 = vmatprep.subr.mxu0 0.0
  %103 = vmatpush1.msra.mxu0 0.0
  %104 = vmatprep.subr.mxu0 0.0
  %105 = vmatpush1.msra.mxu0 0.0
  %106 = vmatprep.subr.mxu0 0.0
  %107 = vmatpush1.msra.mxu0 0.0
  %108 = vmatprep.subr.mxu0 0.0
  %109 = vmatpush1.msra.mxu0 0.0
  %110 = vmatprep.subr.mxu0 0.0
  %111 = vmatpush1.msra.mxu0 0.0
  %112 = vmatprep.subr.mxu0 0.0
  %113 = vmatpush1.msra.mxu0 0.0
  %114 = vmatprep.subr.mxu0 0.0
  %115 = vmatpush1.msra.mxu0 0.0
  %116 = vmatprep.subr.mxu0 0.0
  %117 = vmatpush1.msra.mxu0 %v35
  %118 = vmatprep.subr.mxu0 0.0
  %119 = vmatpush1.msra.mxu0 %v34
  %120 = vmatprep.subr.mxu0 0.0
  %121 = vmatpush1.msra.mxu0 %v33
  %122 = vmatprep.subr.mxu0 0.0
  %123 = vmatpush1.msra.mxu0 %v32
  %124 = vmatprep.subr.mxu0 0.0
  %125 = vmatpush2.msra.mxu0 0.0
  %126 = vmatprep.subr.mxu0 0.0
  %127 = vmatpush2.msra.mxu0 0.0
  %128 = vmatprep.subr.mxu0 0.0
  %129 = vmatpush2.msra.mxu0 0.0
  %130 = vmatprep.subr.mxu0 0.0
  %131 = vmatpush2.msra.mxu0 0.0
  %132 = vmatprep.subr.mxu0 0.0
  %133 = vmatpush2.msra.mxu0 0.0
  %134 = vmatprep.subr.mxu0 0.0
  %135 = vmatpush2.msra.mxu0 0.0
  %136 = vmatprep.subr.mxu0 0.0
  %137 = vmatpush2.msra.mxu0 0.0
  %138 = vmatprep.subr.mxu0 0.0
  %139 = vmatpush2.msra.mxu0 0.0
  %140 = vmatprep.subr.mxu0 0.0
  %141 = vmatpush2.msra.mxu0 0.0
  %142 = vmatprep.subr.mxu0 0.0
  %143 = vmatpush2.msra.mxu0 0.0
  %144 = vmatprep.subr.mxu0 0.0
  %145 = vmatpush2.msra.mxu0 0.0
  %146 = vmatprep.subr.mxu0 0.0
  %147 = vmatpush2.msra.mxu0 0.0
  %148 = vmatprep.subr.mxu0 0.0
  %149 = vmatpush2.msra.mxu0 0.0
  %150 = vmatprep.subr.mxu0 0.0
  %151 = vmatpush2.msra.mxu0 0.0
  %152 = vmatprep.subr.mxu0 0.0
  %153 = vmatpush2.msra.mxu0 0.0
  %154 = vmatprep.subr.mxu0 0.0
  %155 = vmatpush2.msra.mxu0 0.0
  %156 = vmatprep.mubr.f32.mxu0 0.0
  %157 = vmatmul.mubr.f32.gmra.mxu0 %v45
  %v158 = vpop.f32.mrf.mxu0
  %v159 = vadd.f32 %v41, %v158
  %v160 = vpop.f32.mrf.mxu0
  %161 = vmatprep.mubr.f32.mxu0 0.0
  %162 = vmatmul.mubr.f32.gmra.mxu0 %v48
  %v163 = vpop.f32.mrf.mxu0
  %v164 = vadd.f32 %v41, %v163
  %v165 = vpop.f32.mrf.mxu0
  %166 = vmatprep.mubr.f32.mxu0 0.0
  %167 = vmatmul.mubr.f32.gmra.mxu0 %v51
  %v168 = vpop.f32.mrf.mxu0
  %v169 = vadd.f32 %v41, %v168
  %v170 = vpop.f32.mrf.mxu0
  %171 = vmatprep.mubr.f32.mxu0 0.0
  %172 = vmatmul.mubr.f32.gmra.mxu0 %v54
  %v173 = vpop.f32.mrf.mxu0
  %v174 = vadd.f32 %v41, %v173
  %v175 = vpop.f32.mrf.mxu0
  %176 = vmatprep.mubr.f32.mxu0 0.0
  %177 = vmatmul.mubr.f32.gmra.mxu0 %v57
  %v178 = vpop.f32.mrf.mxu0
  %v179 = vadd.f32 %v41, %v178
  %v180 = vpop.f32.mrf.mxu0
  %181 = vmatprep.mubr.f32.mxu0 0.0
  %182 = vmatmul.mubr.f32.gmra.mxu0 %v60
  %v183 = vpop.f32.mrf.mxu0
  %v184 = vadd.f32 %v41, %v183
  %v185 = vpop.f32.mrf.mxu0
  %186 = vmatprep.mubr.f32.mxu0 0.0
  %187 = vmatmul.mubr.f32.gmra.mxu0 %v63
  %v188 = vpop.f32.mrf.mxu0
  %v189 = vadd.f32 %v41, %v188
  %v190 = vpop.f32.mrf.mxu0
  %191 = vmatprep.mubr.f32.mxu0 0.0
  %192 = vmatmul.mubr.f32.gmra.mxu0 %v66
  %v193 = vpop.f32.mrf.mxu0
  %v194 = vadd.f32 %v41, %v193
  %v195 = vpop.f32.mrf.mxu0
  %196 = vmatprep.mubr.f32.mxu0 0.0
  %197 = vmatmul.mubr.f32.gmra.mxu0 %v69
  %v198 = vpop.f32.mrf.mxu0
  %v199 = vadd.f32 %v41, %v198
  %v200 = vpop.f32.mrf.mxu0
  %201 = vmatprep.mubr.f32.mxu0 0.0
  %202 = vmatmul.mubr.f32.gmra.mxu0 %v72
  %v203 = vpop.f32.mrf.mxu0
  %v204 = vadd.f32 %v41, %v203
  %v205 = vpop.f32.mrf.mxu0
  %206 = vmatprep.mubr.f32.mxu0 0.0
  %207 = vmatmul.mubr.f32.gmra.mxu0 %v75
  %v208 = vpop.f32.mrf.mxu0
  %v209 = vadd.f32 %v41, %v208
  %v210 = vpop.f32.mrf.mxu0
  %211 = vmatprep.mubr.f32.mxu0 0.0
  %212 = vmatmul.mubr.f32.gmra.mxu0 %v78
  %v213 = vpop.f32.mrf.mxu0
  %v214 = vadd.f32 %v41, %v213
  %v215 = vpop.f32.mrf.mxu0
  %216 = vmatprep.mubr.f32.mxu0 0.0
  %217 = vmatmul.mubr.f32.gmra.mxu0 %v81
  %v218 = vpop.f32.mrf.mxu0
  %v219 = vadd.f32 %v41, %v218
  %v220 = vpop.f32.mrf.mxu0
  %221 = vmatprep.mubr.f32.mxu0 0.0
  %222 = vmatmul.mubr.f32.gmra.mxu0 %v84
  %v223 = vpop.f32.mrf.mxu0
  %v224 = vadd.f32 %v41, %v223
  %v225 = vpop.f32.mrf.mxu0
  %226 = vmatprep.mubr.f32.mxu0 0.0
  %227 = vmatmul.mubr.f32.gmra.mxu0 %v87
  %v228 = vpop.f32.mrf.mxu0
  %v229 = vadd.f32 %v41, %v228
  %v230 = vpop.f32.mrf.mxu0
  %231 = vmatprep.mubr.f32.mxu0 0.0
  %232 = vmatmul.mubr.f32.gmra.mxu0 %v90
  %v233 = vpop.f32.mrf.mxu0
  %v234 = vadd.f32 %v41, %v233
  %v235 = vpop.f32.mrf.mxu0
  %236 = vdwg.mxu0
  %237 = vxpose.xlu0.b32.start [1/16] %v159, 128
  %238 = vxpose.xlu0.b32.cont [2/16] %v164, 128
  %239 = vxpose.xlu0.b32.cont [3/16] %v169, 128
  %240 = vxpose.xlu0.b32.cont [4/16] %v174, 128
  %241 = vxpose.xlu0.b32.cont [5/16] %v179, 128
  %242 = vxpose.xlu0.b32.cont [6/16] %v184, 128
  %243 = vxpose.xlu0.b32.cont [7/16] %v189, 128
  %244 = vxpose.xlu0.b32.cont [8/16] %v194, 128
  %245 = vxpose.xlu0.b32.cont [9/16] %v199, 128
  %246 = vxpose.xlu0.b32.cont [10/16] %v204, 128
  %247 = vxpose.xlu0.b32.cont [11/16] %v209, 128
  %248 = vxpose.xlu0.b32.cont [12/16] %v214, 128
  %249 = vxpose.xlu0.b32.cont [13/16] %v219, 128
  %250 = vxpose.xlu0.b32.cont [14/16] %v224, 128
  %251 = vxpose.xlu0.b32.cont [15/16] %v229, 128
  %252 = vxpose.xlu0.b32.end [16/16] %v234, 128
  %v253 = vpop.trf.xlu0
  %v254 = vpop.trf.xlu0
  %v255 = vpop.trf.xlu0
  %v256 = vpop.trf.xlu0
  %v257 = vpop.trf.xlu0
  %v258 = vpop.trf.xlu0
  %v259 = vpop.trf.xlu0
  %v260 = vpop.trf.xlu0
  %v261 = vpop.trf.xlu0
  %v262 = vpop.trf.xlu0
  %v263 = vpop.trf.xlu0
  %v264 = vpop.trf.xlu0
  %v265 = vpop.trf.xlu0
  %v266 = vpop.trf.xlu0
  %v267 = vpop.trf.xlu0
  %v268 = vpop.trf.xlu0
  %v269 = vmax.f32 %v253, %v257
  %v270 = vmax.f32 %v254, %v258
  %v271 = vmax.f32 %v255, %v259
  %v272 = vmax.f32 %v256, %v260
  %v273 = vmax.f32 %v269, %v261
  %v274 = vmax.f32 %v270, %v262
  %v275 = vmax.f32 %v271, %v263
  %v276 = vmax.f32 %v272, %v264
  %v277 = vmax.f32 %v273, %v265
  %v278 = vmax.f32 %v274, %v266
  %v279 = vmax.f32 %v275, %v267
  %v280 = vmax.f32 %v276, %v268
  %v281 = vmax.f32 %v277, %v278
  %v282 = vmax.f32 %v279, %v280
  %v283 = vmax.f32 %v281, %v282
  %v284 = vrot.slane %v283, 4
  %v285 = vmax.f32 %v283, %v284
  %v286 = vrot.slane %v285, 2
  %v287 = vmax.f32 %v285, %v286
  %v288 = vrot.slane %v287, 1
  %v289 = vmax.f32 %v287, %v288
  %v290 = vsub.f32 %v253, %v289
  %v291 = vsub.f32 %v254, %v289
  %v292 = vsub.f32 %v255, %v289
  %v293 = vsub.f32 %v256, %v289
  %v294 = vsub.f32 %v257, %v289
  %v295 = vsub.f32 %v258, %v289
  %v296 = vsub.f32 %v259, %v289
  %v297 = vsub.f32 %v260, %v289
  %v298 = vsub.f32 %v261, %v289
  %v299 = vsub.f32 %v262, %v289
  %v300 = vsub.f32 %v263, %v289
  %v301 = vsub.f32 %v264, %v289
  %v302 = vsub.f32 %v265, %v289
  %v303 = vsub.f32 %v266, %v289
  %v304 = vsub.f32 %v267, %v289
  %v305 = vsub.f32 %v268, %v289
  %v306 = vmul.f32 %v290, 1.442695
  %v307 = vpow.pop %v306
  %v308 = vmul.f32 %v291, 1.442695
  %v309 = vpow.pop %v308
  %v310 = vmul.f32 %v292, 1.442695
  %v311 = vpow.pop %v310
  %v312 = vmul.f32 %v293, 1.442695
  %v313 = vpow.pop %v312
  %v314 = vmul.f32 %v294, 1.442695
  %v315 = vpow.pop %v314
  %v316 = vmul.f32 %v295, 1.442695
  %v317 = vpow.pop %v316
  %v318 = vmul.f32 %v296, 1.442695
  %v319 = vpow.pop %v318
  %v320 = vmul.f32 %v297, 1.442695
  %v321 = vpow.pop %v320
  %v322 = vmul.f32 %v298, 1.442695
  %v323 = vpow.pop %v322
  %v324 = vmul.f32 %v299, 1.442695
  %v325 = vpow.pop %v324
  %v326 = vmul.f32 %v300, 1.442695
  %v327 = vpow.pop %v326
  %v328 = vmul.f32 %v301, 1.442695
  %v329 = vpow.pop %v328
  %v330 = vmul.f32 %v302, 1.442695
  %v331 = vpow.pop %v330
  %v332 = vmul.f32 %v303, 1.442695
  %v333 = vpow.pop %v332
  %v334 = vmul.f32 %v304, 1.442695
  %v335 = vpow.pop %v334
  %v336 = vmul.f32 %v305, 1.442695
  %v337 = vpow.pop %v336
  %v338 = vadd.f32 %v307, %v309
  %v339 = vadd.f32 %v338, %v311
  %v340 = vadd.f32 %v339, %v313
  %v341 = vadd.f32 %v340, %v315
  %v342 = vadd.f32 %v341, %v317
  %v343 = vadd.f32 %v342, %v319
  %v344 = vadd.f32 %v343, %v321
  %v345 = vadd.f32 %v344, %v323
  %v346 = vadd.f32 %v345, %v325
  %v347 = vadd.f32 %v346, %v327
  %v348 = vadd.f32 %v347, %v329
  %v349 = vadd.f32 %v348, %v331
  %v350 = vadd.f32 %v349, %v333
  %v351 = vadd.f32 %v350, %v335
  %v352 = vadd.f32 %v351, %v337
  %v353 = vrot.slane %v352, 4
  %v354 = vadd.f32 %v352, %v353
  %v355 = vrot.slane %v354, 2
  %v356 = vadd.f32 %v354, %v355
  %v357 = vrot.slane %v356, 1
  %v358 = vadd.f32 %v356, %v357
  %v359 = vrcp.pop %v358
  %v360 = vmul.f32 1.0, %v359
  %361 = vst [vmem:[%s3] sm:$0x1] %v360
  %v362 = vlaneseq
  %v363 = vshrl.u32 %v362, 7
  %v364 = vadd.s32 %v363, 8
  %v365 = vadd.s32 %v363, 16
  %v366 = vadd.s32 %v363, 24
  %v367 = vadd.s32 %v363, 32
  %v368 = vadd.s32 %v363, 40
  %v369 = vadd.s32 %v363, 48
  %v370 = vadd.s32 %v363, 56
  %v371 = vadd.s32 %v363, 64
  %v372 = vadd.s32 %v363, 72
  %v373 = vadd.s32 %v363, 80
  %v374 = vadd.s32 %v363, 88
  %v375 = vadd.s32 %v363, 96
  %v376 = vadd.s32 %v363, 104
  %v377 = vadd.s32 %v363, 112
  %v378 = vadd.s32 %v363, 120
  %v379 = vcvt.s32.f32 %v363
  %v380 = vcvt.s32.f32 %v364
  %v381 = vcvt.s32.f32 %v365
  %v382 = vcvt.s32.f32 %v366
  %v383 = vcvt.s32.f32 %v367
  %v384 = vcvt.s32.f32 %v368
  %v385 = vcvt.s32.f32 %v369
  %v386 = vcvt.s32.f32 %v370
  %v387 = vcvt.s32.f32 %v371
  %v388 = vcvt.s32.f32 %v372
  %v389 = vcvt.s32.f32 %v373
  %v390 = vcvt.s32.f32 %v374
  %v391 = vcvt.s32.f32 %v375
  %v392 = vcvt.s32.f32 %v376
  %v393 = vcvt.s32.f32 %v377
  %v394 = vcvt.s32.f32 %v378
  %vm395 = vcmp.eq.f32.partialorder %v253, %v289
  %vm396 = vcmp.eq.f32.partialorder %v254, %v289
  %vm397 = vcmp.eq.f32.partialorder %v255, %v289
  %vm398 = vcmp.eq.f32.partialorder %v256, %v289
  %vm399 = vcmp.eq.f32.partialorder %v257, %v289
  %vm400 = vcmp.eq.f32.partialorder %v258, %v289
  %vm401 = vcmp.eq.f32.partialorder %v259, %v289
  %vm402 = vcmp.eq.f32.partialorder %v260, %v289
  %vm403 = vcmp.eq.f32.partialorder %v261, %v289
  %vm404 = vcmp.eq.f32.partialorder %v262, %v289
  %vm405 = vcmp.eq.f32.partialorder %v263, %v289
  %vm406 = vcmp.eq.f32.partialorder %v264, %v289
  %vm407 = vcmp.eq.f32.partialorder %v265, %v289
  %vm408 = vcmp.eq.f32.partialorder %v266, %v289
  %vm409 = vcmp.eq.f32.partialorder %v267, %v289
  %vm410 = vcmp.eq.f32.partialorder %v268, %v289
  %v411 = vsel %vm395, %v379, 128.0
  %v412 = vsel %vm396, %v380, 128.0
  %v413 = vsel %vm397, %v381, 128.0
  %v414 = vsel %vm398, %v382, 128.0
  %v415 = vsel %vm399, %v383, 128.0
  %v416 = vsel %vm400, %v384, 128.0
  %v417 = vsel %vm401, %v385, 128.0
  %v418 = vsel %vm402, %v386, 128.0
  %v419 = vsel %vm403, %v387, 128.0
  %v420 = vsel %vm404, %v388, 128.0
  %v421 = vsel %vm405, %v389, 128.0
  %v422 = vsel %vm406, %v390, 128.0
  %v423 = vsel %vm407, %v391, 128.0
  %v424 = vsel %vm408, %v392, 128.0
  %v425 = vsel %vm409, %v393, 128.0
  %v426 = vsel %vm410, %v394, 128.0
  %v427 = vmin.f32 %v411, %v415
  %v428 = vmin.f32 %v412, %v416
  %v429 = vmin.f32 %v413, %v417
  %v430 = vmin.f32 %v414, %v418
  %v431 = vmin.f32 %v427, %v419
  %v432 = vmin.f32 %v428, %v420
  %v433 = vmin.f32 %v429, %v421
  %v434 = vmin.f32 %v430, %v422
  %v435 = vmin.f32 %v431, %v423
  %v436 = vmin.f32 %v432, %v424
  %v437 = vmin.f32 %v433, %v425
  %v438 = vmin.f32 %v434, %v426
  %v439 = vmin.f32 %v435, %v436
  %v440 = vmin.f32 %v437, %v438
  %v441 = vmin.f32 %v439, %v440
  %v442 = vrot.slane %v441, 4
  %v443 = vmin.f32 %v441, %v442
  %v444 = vrot.slane %v443, 2
  %v445 = vmin.f32 %v443, %v444
  %v446 = vrot.slane %v445, 1
  %v447 = vmin.f32 %v445, %v446
  %v448 = vcvt.f32.s32.to.zero.pseudo %v447
  %449 = vst [vmem:[%s4] sm:$0x1] %v448
  // Predicated region
  $region14: #{switch_feed_forward.2} parent=0 // pred_check
    _
  $region15: #{switch_feed_forward.2} parent=0 // pred_check_branch
    %451 = sbr.rel (0) target = $region17
  $region16: #{switch_feed_forward.2} parent=0 // pred_region
    _
  $region17: #{switch_feed_forward.2} parent=0 // pred_fallthru
    _
  // Predicated region
  $region18: #{switch_feed_forward.2} parent=0 // pred_check
    _
  $region19: #{switch_feed_forward.2} parent=0 // pred_check_branch
    %453 = sbr.rel (0) target = $region21
  $region20: #{switch_feed_forward.2} parent=0 // pred_region
    _
  $region21: #{switch_feed_forward.2} parent=0 // pred_fallthru
    _
  // Predicated region
  $region22: #{switch_feed_forward.2} parent=0 // pred_check
    _
  $region23: #{switch_feed_forward.2} parent=0 // pred_check_branch
    %455 = sbr.rel (0) target = $region25
  $region24: #{switch_feed_forward.2} parent=0 // pred_region
    _
  $region25: #{switch_feed_forward.2} parent=0 // pred_fallthru
    _
  // Predicated region
  $region26: #{switch_feed_forward.2} parent=0 // pred_check
    _
  $region27: #{switch_feed_forward.2} parent=0 // pred_check_branch
    %457 = sbr.rel (0) target = $region29
  $region28: #{switch_feed_forward.2} parent=0 // pred_region
    _
  $region29: #{switch_feed_forward.2} parent=0 // pred_fallthru
    _

// kernel: switch_feed_forward.3
$region0: #{switch_feed_forward.3}
  #allocation0 [shape = 'u32[]', space=smem, size = 0x4, offset = 0x4, fixed_abs, tag = 'smem constant byte address 0x4 - core index']
  #allocation1 [shape = 'u32[144,128]{1,0:T(1,128)}', space=vmem, size = 0x12000, scoped, tag = 'internal scratch']
  #allocation2 [shape = 'f32[256,32]{1,0:T(8,128)}', space=vmem, size = 0x20000, scoped, tag = 'scratch operand']
  #allocation3 [shape = 's32[1]{0}', space=sflag, size = 0x4, scoped, tag = 'scoped memory for switch_feed_forward.3']
  #allocation4 [shape = 'u8[512]{0}', space=smem, size = 0x200, scoped, tag = 'prefetched SMEM operand 0']
  #allocation5 [shape = 'u8[512]{0}', space=smem, size = 0x200, scoped, tag = 'prefetched SMEM operand 1']
  %s0 = inlined_call_operand.vmem [shape: s32[5], index: 0, kind: input, shape index: {}]
  %s1 = inlined_call_operand.vmem [shape: s32[5], index: 1, kind: input, shape index: {}]
  %s2 = inlined_call_operand.vmem [shape: f32[1280,32], index: 2, kind: input, shape index: {}]
  %s3 = inlined_call_operand.vmem [shape: f32[1280,1], index: 3, kind: input, shape index: {}]
  %s4 = inlined_call_operand.vmem [shape: f32[4,32,64], index: 4, kind: input, shape index: {}]
  %s5 = inlined_call_operand.vmem [shape: f32[4,1,64], index: 5, kind: input, shape index: {}]
  %s6 = inlined_call_operand.vmem [shape: f32[4,64,32], index: 6, kind: input, shape index: {}]
  %s7 = inlined_call_operand.vmem [shape: f32[4,1,32], index: 7, kind: input, shape index: {}]
  %s8 = inlined_call_operand.vmem [shape: f32[1280,32], index: 8, kind: output, shape index: {}]
  %s9 = sld [smem:[#allocation0]]
  $region69: #{switch_feed_forward.3} parent=0
    _
  %s11 = ssub.s32 1, %s9
  %s12 = scalar_select 0, %s11, %s9
  %s13 = sshll.u32 %s0, 4
  %s14 = int_to_ptr.vmem [resolvable:$true] %s13
  %16 = dma.vmem_to_smem %s14, 16, [#allocation4], [#allocation3]
  %s17 = sshll.u32 %s1, 4
  %s18 = int_to_ptr.vmem [resolvable:$true] %s17
  %20 = dma.vmem_to_smem %s18, 16, [#allocation5], [#allocation3]
  %21 = dma.done [#allocation3], 32
  %22 = sfence
  loop: start=0, step=1, limit=7
  $region2: #{switch_feed_forward.3} parent=0 // loop_pre_header
    _
  $region3: #{switch_feed_forward.3} parent=0 // loop_header
    %s24 = sphi 0, %s28
    %p25 = scmp.ge.s32.totalorder %s24, 7
    %s31 = sphi 0, %s43
    %s32 = sphi 0, %s39
    %s33 = sphi 0, %s31
    %s34 = sphi 0, %s32
    %s35 = sphi 0, %s33
    %s36 = sphi 0, %s34
    %s46 = sphi 0, %s48
    %s49 = sphi 0, %s46
    %s50 = sphi 0, %s49
    %s66 = sphi 0, %s50
    %s72 = sphi 0, %s74
    %s75 = sphi 0, %s72
    %s76 = sphi 0, %s75
    %s92 = sphi 0, %s76
    %s102 = sphi 0, %s104
    %s105 = sphi 0, %s102
    %s106 = sphi 0, %s105
    %s122 = sphi 0, %s106
    %s132 = sphi 0, %s134
    %s135 = sphi 0, %s132
    %s136 = sphi 0, %s135
    %s152 = sphi 0, %s136
    %s162 = sphi 0, %s164
    %s165 = sphi 0, %s162
    %s166 = sphi 0, %s165
    %s182 = sphi 0, %s166
    %s190 = sphi 0, %s192
    %s193 = sphi 0, %s190
    %s194 = sphi 0, %s193
    %s210 = sphi 0, %s194
    %s216 = sphi 0, %s218
    %s219 = sphi 0, %s216
    %s220 = sphi 0, %s219
    %s236 = sphi 0, %s220
  $region4: #{switch_feed_forward.3} parent=0 // loop_header_branch
    %27 = sbr.rel (%p25) target = $region8
  $region5: #{switch_feed_forward.3} parent=0 // loop_body
    %s29 = ssub.s32 %s24, 1
    %s30 = ssub.s32 %s24, 2
    %s37 = sadd.s32 1, %s32
    %p38 = scmp.ge.s32.totalorder %s37, 1
    %s39 = scalar_select %p38, 0, %s37
    %s40 = sadd.s32 1, %s31
    %s41 = scalar_select %p38, %s40, %s31
    %p42 = scmp.ge.s32.totalorder %s41, 5
    %s43 = scalar_select %p42, 0, %s41
    %s44 = ssub.s32 %s31, %s43
    %p45 = scmp.eq.s32.totalorder %s44, 0
    %s47 = sadd.s32 %s46, 1
    %s48 = scalar_select %p45, %s46, %s47
    %p51 = pneg %p45
    %p52 = scmp.eq.s32.totalorder %s24, 4
    %p53 = por %p51, %p52
    %p54 = scmp.ne.s32.totalorder %s46, %s49
    %p55 = scmp.eq.s32.totalorder %s24, 0
    %p56 = por %p54, %p55
    %p57 = scmp.ne.s32.totalorder %s46, %s49
    %p58 = scmp.eq.s32.totalorder %s29, 4
    %p59 = por %p57, %p58
    %p60 = scmp.ne.s32.totalorder %s49, %s50
    %p61 = scmp.eq.s32.totalorder %s29, 0
    %p62 = por %p60, %p61
    %p63 = scmp.ne.s32.totalorder %s49, %s50
    %p64 = scmp.eq.s32.totalorder %s30, 4
    %p65 = por %p63, %p64
    %p67 = scmp.ne.s32.totalorder %s50, %s66
    %p68 = scmp.eq.s32.totalorder %s30, 0
    %p69 = por %p67, %p68
    %s70 = ssub.s32 %s31, %s43
    %p71 = scmp.eq.s32.totalorder %s70, 0
    %s73 = sadd.s32 %s72, 1
    %s74 = scalar_select %p71, %s72, %s73
    %p77 = pneg %p71
    %p78 = scmp.eq.s32.totalorder %s24, 4
    %p79 = por %p77, %p78
    %p80 = scmp.ne.s32.totalorder %s72, %s75
    %p81 = scmp.eq.s32.totalorder %s24, 0
    %p82 = por %p80, %p81
    %p83 = scmp.ne.s32.totalorder %s72, %s75
    %p84 = scmp.eq.s32.totalorder %s29, 4
    %p85 = por %p83, %p84
    %p86 = scmp.ne.s32.totalorder %s75, %s76
    %p87 = scmp.eq.s32.totalorder %s29, 0
    %p88 = por %p86, %p87
    %p89 = scmp.ne.s32.totalorder %s75, %s76
    %p90 = scmp.eq.s32.totalorder %s30, 4
    %p91 = por %p89, %p90
    %p93 = scmp.ne.s32.totalorder %s76, %s92
    %p94 = scmp.eq.s32.totalorder %s30, 0
    %p95 = por %p93, %p94
    %s96 = sld [smem:[#allocation4 + %s31]]
    %s97 = sld [smem:[#allocation4 + %s43]]
    %s98 = ssub.s32 %s96, %s97
    %s99 = ssub.s32 %s32, %s39
    %s100 = sor.u32 %s98, %s99
    %p101 = scmp.eq.s32.totalorder %s100, 0
    %s103 = sadd.s32 %s102, 1
    %s104 = scalar_select %p101, %s102, %s103
    %p107 = pneg %p101
    %p108 = scmp.eq.s32.totalorder %s24, 4
    %p109 = por %p107, %p108
    %p110 = scmp.ne.s32.totalorder %s102, %s105
    %p111 = scmp.eq.s32.totalorder %s24, 0
    %p112 = por %p110, %p111
    %p113 = scmp.ne.s32.totalorder %s102, %s105
    %p114 = scmp.eq.s32.totalorder %s29, 4
    %p115 = por %p113, %p114
    %p116 = scmp.ne.s32.totalorder %s105, %s106
    %p117 = scmp.eq.s32.totalorder %s29, 0
    %p118 = por %p116, %p117
    %p119 = scmp.ne.s32.totalorder %s105, %s106
    %p120 = scmp.eq.s32.totalorder %s30, 4
    %p121 = por %p119, %p120
    %p123 = scmp.ne.s32.totalorder %s106, %s122
    %p124 = scmp.eq.s32.totalorder %s30, 0
    %p125 = por %p123, %p124
    %s126 = sld [smem:[#allocation4 + %s31]]
    %s127 = sld [smem:[#allocation4 + %s43]]
    %s128 = ssub.s32 %s126, %s127
    %s129 = ssub.s32 %s32, %s39
    %s130 = sor.u32 %s128, %s129
    %p131 = scmp.eq.s32.totalorder %s130, 0
    %s133 = sadd.s32 %s132, 1
    %s134 = scalar_select %p131, %s132, %s133
    %p137 = pneg %p131
    %p138 = scmp.eq.s32.totalorder %s24, 4
    %p139 = por %p137, %p138
    %p140 = scmp.ne.s32.totalorder %s132, %s135
    %p141 = scmp.eq.s32.totalorder %s24, 0
    %p142 = por %p140, %p141
    %p143 = scmp.ne.s32.totalorder %s132, %s135
    %p144 = scmp.eq.s32.totalorder %s29, 4
    %p145 = por %p143, %p144
    %p146 = scmp.ne.s32.totalorder %s135, %s136
    %p147 = scmp.eq.s32.totalorder %s29, 0
    %p148 = por %p146, %p147
    %p149 = scmp.ne.s32.totalorder %s135, %s136
    %p150 = scmp.eq.s32.totalorder %s30, 4
    %p151 = por %p149, %p150
    %p153 = scmp.ne.s32.totalorder %s136, %s152
    %p154 = scmp.eq.s32.totalorder %s30, 0
    %p155 = por %p153, %p154
    %s156 = sld [smem:[#allocation4 + %s31]]
    %s157 = sld [smem:[#allocation4 + %s43]]
    %s158 = ssub.s32 %s156, %s157
    %s159 = ssub.s32 %s32, %s39
    %s160 = sor.u32 %s158, %s159
    %p161 = scmp.eq.s32.totalorder %s160, 0
    %s163 = sadd.s32 %s162, 1
    %s164 = scalar_select %p161, %s162, %s163
    %p167 = pneg %p161
    %p168 = scmp.eq.s32.totalorder %s24, 4
    %p169 = por %p167, %p168
    %p170 = scmp.ne.s32.totalorder %s162, %s165
    %p171 = scmp.eq.s32.totalorder %s24, 0
    %p172 = por %p170, %p171
    %p173 = scmp.ne.s32.totalorder %s162, %s165
    %p174 = scmp.eq.s32.totalorder %s29, 4
    %p175 = por %p173, %p174
    %p176 = scmp.ne.s32.totalorder %s165, %s166
    %p177 = scmp.eq.s32.totalorder %s29, 0
    %p178 = por %p176, %p177
    %p179 = scmp.ne.s32.totalorder %s165, %s166
    %p180 = scmp.eq.s32.totalorder %s30, 4
    %p181 = por %p179, %p180
    %p183 = scmp.ne.s32.totalorder %s166, %s182
    %p184 = scmp.eq.s32.totalorder %s30, 0
    %p185 = por %p183, %p184
    %s186 = sld [smem:[#allocation4 + %s31]]
    %s187 = sld [smem:[#allocation4 + %s43]]
    %s188 = ssub.s32 %s186, %s187
    %p189 = scmp.eq.s32.totalorder %s188, 0
    %s191 = sadd.s32 %s190, 1
    %s192 = scalar_select %p189, %s190, %s191
    %p195 = pneg %p189
    %p196 = scmp.eq.s32.totalorder %s24, 4
    %p197 = por %p195, %p196
    %p198 = scmp.ne.s32.totalorder %s190, %s193
    %p199 = scmp.eq.s32.totalorder %s24, 0
    %p200 = por %p198, %p199
    %p201 = scmp.ne.s32.totalorder %s190, %s193
    %p202 = scmp.eq.s32.totalorder %s29, 4
    %p203 = por %p201, %p202
    %p204 = scmp.ne.s32.totalorder %s193, %s194
    %p205 = scmp.eq.s32.totalorder %s29, 0
    %p206 = por %p204, %p205
    %p207 = scmp.ne.s32.totalorder %s193, %s194
    %p208 = scmp.eq.s32.totalorder %s30, 4
    %p209 = por %p207, %p208
    %p211 = scmp.ne.s32.totalorder %s194, %s210
    %p212 = scmp.eq.s32.totalorder %s30, 0
    %p213 = por %p211, %p212
    %s214 = ssub.s32 %s31, %s43
    %p215 = scmp.eq.s32.totalorder %s214, 0
    %s217 = sadd.s32 %s216, 1
    %s218 = scalar_select %p215, %s216, %s217
    %p221 = pneg %p215
    %p222 = scmp.eq.s32.totalorder %s24, 4
    %p223 = por %p221, %p222
    %p224 = scmp.ne.s32.totalorder %s216, %s219
    %p225 = scmp.eq.s32.totalorder %s24, 0
    %p226 = por %p224, %p225
    %p227 = scmp.ne.s32.totalorder %s216, %s219
    %p228 = scmp.eq.s32.totalorder %s29, 4
    %p229 = por %p227, %p228
    %p230 = scmp.ne.s32.totalorder %s219, %s220
    %p231 = scmp.eq.s32.totalorder %s29, 0
    %p232 = por %p230, %p231
    %p233 = scmp.ne.s32.totalorder %s219, %s220
    %p234 = scmp.eq.s32.totalorder %s30, 4
    %p235 = por %p233, %p234
    %p237 = scmp.ne.s32.totalorder %s220, %s236
    %p238 = scmp.eq.s32.totalorder %s30, 0
    %p239 = por %p237, %p238
    %p240 = scmp.le.s32.totalorder 1, %s24
    %p241 = scmp.lt.s32.totalorder %s24, 6
    %p242 = pnand %p240, %p241
    %p243 = pneg %p242
    // Predicated region
    $region9: #{switch_feed_forward.3} parent=5 // pred_check
      _
    $region10: #{switch_feed_forward.3} parent=5 // pred_check_branch
      %245 = sbr.rel (%p242) target = $region12
    $region11: #{switch_feed_forward.3} parent=5 // pred_region
      %s246 = ssub.s32 %s24, 1
    $region12: #{switch_feed_forward.3} parent=5 // pred_fallthru
      _
    %p247 = scmp.lt.s32.totalorder %s24, 5
    // Predicated region
    $region13: #{switch_feed_forward.3} parent=5 // pred_check
      %p248 = pneg %p247
    $region14: #{switch_feed_forward.3} parent=5 // pred_check_branch
      %250 = sbr.rel (%p248) target = $region16
    $region15: #{switch_feed_forward.3} parent=5 // pred_region
      // Predicated region
      $region17: #{switch_feed_forward.3} parent=15 // pred_check
        %p251 = pneg %p56
      $region18: #{switch_feed_forward.3} parent=15 // pred_check_branch
        %253 = sbr.rel (%p251) target = $region20
      $region19: #{switch_feed_forward.3} parent=15 // pred_region
        %s254 = smul.u32 32, %s31
        %p255 = scmp.lt.s32.totalorder %s254, 159
        %s256 = scalar_select %p255, %s254, 159
        %s257 = smul.addr %s256, 8
        %s258 = scalar_lea.vmem %s2, %s257
        %s259 = smul.u32 32, %s31
      $region20: #{switch_feed_forward.3} parent=15 // pred_fallthru
        _
      // Predicated region
      $region21: #{switch_feed_forward.3} parent=15 // pred_check
        %p260 = pneg %p82
      $region22: #{switch_feed_forward.3} parent=15 // pred_check_branch
        %262 = sbr.rel (%p260) target = $region24
      $region23: #{switch_feed_forward.3} parent=15 // pred_region
        %s263 = smul.u32 32, %s31
        %p264 = scmp.lt.s32.totalorder %s263, 159
        %s265 = scalar_select %p264, %s263, 159
        %s266 = smul.addr %s265, 8
        %s267 = scalar_lea.vmem %s3, %s266
        %s268 = smul.u32 32, %s31
      $region24: #{switch_feed_forward.3} parent=15 // pred_fallthru
        _
      // Predicated region
      $region25: #{switch_feed_forward.3} parent=15 // pred_check
        %p269 = pneg %p112
      $region26: #{switch_feed_forward.3} parent=15 // pred_check_branch
        %271 = sbr.rel (%p269) target = $region28
      $region27: #{switch_feed_forward.3} parent=15 // pred_region
        %s272 = sld [smem:[#allocation4 + %s31]]
        %p273 = scmp.lt.s32.totalorder %s272, 3
        %s274 = scalar_select %p273, %s272, 3
        %p275 = scmp.lt.s32.totalorder %s32, 0
        %s276 = scalar_select %p275, %s32, 0
        %s277 = smul.addr %s274, 4
        %s278 = sadd.s32 %s276, %s277
        %s279 = smul.addr %s278, 8
        %s280 = scalar_lea.vmem %s4, %s279
        %s281 = sld [smem:[#allocation4 + %s31]]
      $region28: #{switch_feed_forward.3} parent=15 // pred_fallthru
        _
      // Predicated region
      $region29: #{switch_feed_forward.3} parent=15 // pred_check
        %p282 = pneg %p142
      $region30: #{switch_feed_forward.3} parent=15 // pred_check_branch
        %284 = sbr.rel (%p282) target = $region32
      $region31: #{switch_feed_forward.3} parent=15 // pred_region
        %s285 = sld [smem:[#allocation4 + %s31]]
        %p286 = scmp.lt.s32.totalorder %s285, 3
        %s287 = scalar_select %p286, %s285, 3
        %p288 = scmp.lt.s32.totalorder %s32, 0
        %s289 = scalar_select %p288, %s32, 0
        %s290 = sadd.s32 %s289, %s287
        %s291 = scalar_lea.vmem %s5, %s290
        %s292 = sld [smem:[#allocation4 + %s31]]
      $region32: #{switch_feed_forward.3} parent=15 // pred_fallthru
        _
      // Predicated region
      $region33: #{switch_feed_forward.3} parent=15 // pred_check
        %p293 = pneg %p172
      $region34: #{switch_feed_forward.3} parent=15 // pred_check_branch
        %295 = sbr.rel (%p293) target = $region36
      $region35: #{switch_feed_forward.3} parent=15 // pred_region
        %s296 = sld [smem:[#allocation4 + %s31]]
        %s297 = smul.u32 8, %s32
        %p298 = scmp.lt.s32.totalorder %s296, 3
        %s299 = scalar_select %p298, %s296, 3
        %p300 = scmp.lt.s32.totalorder %s297, 7
        %s301 = scalar_select %p300, %s297, 7
        %s302 = smul.addr %s299, 8
        %s303 = sadd.s32 %s301, %s302
        %s304 = smul.addr %s303, 8
        %s305 = scalar_lea.vmem %s6, %s304
        %s306 = sld [smem:[#allocation4 + %s31]]
        %s307 = smul.u32 8, %s32
      $region36: #{switch_feed_forward.3} parent=15 // pred_fallthru
        _
      // Predicated region
      $region37: #{switch_feed_forward.3} parent=15 // pred_check
        %p308 = pneg %p200
      $region38: #{switch_feed_forward.3} parent=15 // pred_check_branch
        %310 = sbr.rel (%p308) target = $region40
      $region39: #{switch_feed_forward.3} parent=15 // pred_region
        %s311 = sld [smem:[#allocation4 + %s31]]
        %p312 = scmp.lt.s32.totalorder %s311, 3
        %s313 = scalar_select %p312, %s311, 3
        %s314 = scalar_lea.vmem %s7, %s313
        %s315 = sld [smem:[#allocation4 + %s31]]
      $region40: #{switch_feed_forward.3} parent=15 // pred_fallthru
        _
    $region16: #{switch_feed_forward.3} parent=5 // pred_fallthru
      _
    %p316 = scmp.le.s32.totalorder 1, %s24
    %p317 = scmp.lt.s32.totalorder %s24, 6
    %p318 = pnand %p316, %p317
    %p319 = pneg %p318
    // Predicated region
    $region41: #{switch_feed_forward.3} parent=5 // pred_check
      _
    $region42: #{switch_feed_forward.3} parent=5 // pred_check_branch
      %321 = sbr.rel (%p318) target = $region44
    $region43: #{switch_feed_forward.3} parent=5 // pred_region
      %s322 = ssub.s32 %s24, 1
      %s323 = smul.u32 32, %s33
      %p324 = scmp.lt.s32.totalorder %s323, 159
      %s325 = scalar_select %p324, %s323, 159
      %s326 = smul.addr %s325, 8
      %s327 = scalar_lea.vmem %s2, %s326
      %p328 = pneg %p62
      %p329 = pneg %p59
      %s330 = smul.u32 32, %s33
      %p331 = scmp.lt.s32.totalorder %s330, 159
      %s332 = scalar_select %p331, %s330, 159
      %s333 = smul.addr %s332, 8
      %s334 = scalar_lea.vmem %s3, %s333
      %p335 = pneg %p88
      %p336 = pneg %p85
      %s337 = sld [smem:[#allocation4 + %s33]]
      %p338 = scmp.lt.s32.totalorder %s337, 3
      %s339 = scalar_select %p338, %s337, 3
      %p340 = scmp.lt.s32.totalorder %s34, 0
      %s341 = scalar_select %p340, %s34, 0
      %s342 = smul.addr %s339, 4
      %s343 = sadd.s32 %s341, %s342
      %s344 = smul.addr %s343, 8
      %s345 = scalar_lea.vmem %s4, %s344
      %p346 = pneg %p118
      %p347 = pneg %p115
      %s348 = sld [smem:[#allocation4 + %s33]]
      %p349 = scmp.lt.s32.totalorder %s348, 3
      %s350 = scalar_select %p349, %s348, 3
      %p351 = scmp.lt.s32.totalorder %s34, 0
      %s352 = scalar_select %p351, %s34, 0
      %s353 = sadd.s32 %s352, %s350
      %s354 = scalar_lea.vmem %s5, %s353
      %p355 = pneg %p148
      %p356 = pneg %p145
      %s357 = sld [smem:[#allocation4 + %s33]]
      %s358 = smul.u32 8, %s34
      %p359 = scmp.lt.s32.totalorder %s357, 3
      %s360 = scalar_select %p359, %s357, 3
      %p361 = scmp.lt.s32.totalorder %s358, 7
      %s362 = scalar_select %p361, %s358, 7
      %s363 = smul.addr %s360, 8
      %s364 = sadd.s32 %s362, %s363
      %s365 = smul.addr %s364, 8
      %s366 = scalar_lea.vmem %s6, %s365
      %p367 = pneg %p178
      %p368 = pneg %p175
      %s369 = sld [smem:[#allocation4 + %s33]]
      %p370 = scmp.lt.s32.totalorder %s369, 3
      %s371 = scalar_select %p370, %s369, 3
      %s372 = scalar_lea.vmem %s7, %s371
      %p373 = pneg %p206
      %p374 = pneg %p203
      %p375 = pneg %p232
      %p376 = pneg %p229
      %s377 = smul.u32 32, %s33
      %p378 = scmp.lt.s32.totalorder %s377, 159
      %s379 = scalar_select %p378, %s377, 159
      %s380 = smul.addr %s379, 8
      %s381 = scalar_lea.vmem %s8, %s380
      %s382 = smul.u32 32, %s33
      %p383 = scmp.lt.s32.totalorder %s382, 159
      %s384 = scalar_select %p383, %s382, 159
      %s385 = smul.addr %s384, 8
      %s386 = scalar_lea.vmem %s2, %s385
      %s387 = smul.u32 32, %s33
      %s388 = smul.u32 32, %s33
      %p389 = scmp.lt.s32.totalorder %s388, 159
      %s390 = scalar_select %p389, %s388, 159
      %s391 = smul.addr %s390, 8
      %s392 = scalar_lea.vmem %s3, %s391
      %s393 = smul.u32 32, %s33
      %s394 = sld [smem:[#allocation4 + %s33]]
      %p395 = scmp.lt.s32.totalorder %s394, 3
      %s396 = scalar_select %p395, %s394, 3
      %p397 = scmp.lt.s32.totalorder %s34, 0
      %s398 = scalar_select %p397, %s34, 0
      %s399 = smul.addr %s396, 4
      %s400 = sadd.s32 %s398, %s399
      %s401 = smul.addr %s400, 8
      %s402 = scalar_lea.vmem %s4, %s401
      %s403 = sld [smem:[#allocation4 + %s33]]
      %s404 = sld [smem:[#allocation4 + %s33]]
      %p405 = scmp.lt.s32.totalorder %s404, 3
      %s406 = scalar_select %p405, %s404, 3
      %p407 = scmp.lt.s32.totalorder %s34, 0
      %s408 = scalar_select %p407, %s34, 0
      %s409 = sadd.s32 %s408, %s406
      %s410 = scalar_lea.vmem %s5, %s409
      %s411 = sld [smem:[#allocation4 + %s33]]
      %s412 = sld [smem:[#allocation4 + %s33]]
      %s413 = smul.u32 8, %s34
      %p414 = scmp.lt.s32.totalorder %s412, 3
      %s415 = scalar_select %p414, %s412, 3
      %p416 = scmp.lt.s32.totalorder %s413, 7
      %s417 = scalar_select %p416, %s413, 7
      %s418 = smul.addr %s415, 8
      %s419 = sadd.s32 %s417, %s418
      %s420 = smul.addr %s419, 8
      %s421 = scalar_lea.vmem %s6, %s420
      %s422 = sld [smem:[#allocation4 + %s33]]
      %s423 = smul.u32 8, %s34
      %s424 = sld [smem:[#allocation4 + %s33]]
      %p425 = scmp.lt.s32.totalorder %s424, 3
      %s426 = scalar_select %p425, %s424, 3
      %s427 = scalar_lea.vmem %s7, %s426
      %s428 = sld [smem:[#allocation4 + %s33]]
      %s429 = smul.u32 32, %s33
      %p430 = scmp.lt.s32.totalorder %s429, 159
      %s431 = scalar_select %p430, %s429, 159
      %s432 = smul.addr %s431, 8
      %s433 = scalar_lea.vmem %s8, %s432
      %s434 = smul.u32 32, %s33
      %p435 = scmp.eq.s32.totalorder %s34, 0
      // Predicated region
      $region45: #{switch_feed_forward.3} parent=43 // pred_check
        %p436 = pneg %p435
      $region46: #{switch_feed_forward.3} parent=43 // pred_check_branch
        %438 = sbr.rel (%p436) target = $region48
      $region47: #{switch_feed_forward.3} parent=43 // pred_region
        %vm439 = vcmask 261120
        %440 = vst.msk [vmem:[#allocation2] sm:$0xff] %vm439, 0.0
        %441 = vst.msk [vmem:[#allocation2 + $0x8] sm:$0xff] %vm439, 0.0
        %442 = vst.msk [vmem:[#allocation2 + $0x10] sm:$0xff] %vm439, 0.0
        %443 = vst.msk [vmem:[#allocation2 + $0x18] sm:$0xff] %vm439, 0.0
        %444 = vst.msk [vmem:[#allocation2 + $0x20] sm:$0xff] %vm439, 0.0
        %445 = vst.msk [vmem:[#allocation2 + $0x28] sm:$0xff] %vm439, 0.0
        %446 = vst.msk [vmem:[#allocation2 + $0x30] sm:$0xff] %vm439, 0.0
        %447 = vst.msk [vmem:[#allocation2 + $0x38] sm:$0xff] %vm439, 0.0
        %448 = vst.msk [vmem:[#allocation2 + $0x40] sm:$0xff] %vm439, 0.0
        %449 = vst.msk [vmem:[#allocation2 + $0x48] sm:$0xff] %vm439, 0.0
        %450 = vst.msk [vmem:[#allocation2 + $0x50] sm:$0xff] %vm439, 0.0
        %451 = vst.msk [vmem:[#allocation2 + $0x58] sm:$0xff] %vm439, 0.0
        %452 = vst.msk [vmem:[#allocation2 + $0x60] sm:$0xff] %vm439, 0.0
        %453 = vst.msk [vmem:[#allocation2 + $0x68] sm:$0xff] %vm439, 0.0
        %454 = vst.msk [vmem:[#allocation2 + $0x70] sm:$0xff] %vm439, 0.0
        %455 = vst.msk [vmem:[#allocation2 + $0x78] sm:$0xff] %vm439, 0.0
        %456 = vst.msk [vmem:[#allocation2 + $0x80] sm:$0xff] %vm439, 0.0
        %457 = vst.msk [vmem:[#allocation2 + $0x88] sm:$0xff] %vm439, 0.0
        %458 = vst.msk [vmem:[#allocation2 + $0x90] sm:$0xff] %vm439, 0.0
        %459 = vst.msk [vmem:[#allocation2 + $0x98] sm:$0xff] %vm439, 0.0
        %460 = vst.msk [vmem:[#allocation2 + $0xa0] sm:$0xff] %vm439, 0.0
        %461 = vst.msk [vmem:[#allocation2 + $0xa8] sm:$0xff] %vm439, 0.0
        %462 = vst.msk [vmem:[#allocation2 + $0xb0] sm:$0xff] %vm439, 0.0
        %463 = vst.msk [vmem:[#allocation2 + $0xb8] sm:$0xff] %vm439, 0.0
        %464 = vst.msk [vmem:[#allocation2 + $0xc0] sm:$0xff] %vm439, 0.0
        %465 = vst.msk [vmem:[#allocation2 + $0xc8] sm:$0xff] %vm439, 0.0
        %466 = vst.msk [vmem:[#allocation2 + $0xd0] sm:$0xff] %vm439, 0.0
        %467 = vst.msk [vmem:[#allocation2 + $0xd8] sm:$0xff] %vm439, 0.0
        %468 = vst.msk [vmem:[#allocation2 + $0xe0] sm:$0xff] %vm439, 0.0
        %469 = vst.msk [vmem:[#allocation2 + $0xe8] sm:$0xff] %vm439, 0.0
        %470 = vst.msk [vmem:[#allocation2 + $0xf0] sm:$0xff] %vm439, 0.0
        %471 = vst.msk [vmem:[#allocation2 + $0xf8] sm:$0xff] %vm439, 0.0
      $region48: #{switch_feed_forward.3} parent=43 // pred_fallthru
        _
      %s472 = sld [smem:[#allocation5 + %s33]]
      %p473 = scmp.gt.s32.totalorder %s472, 0
      // Predicated region
      $region49: #{switch_feed_forward.3} parent=43 // pred_check
        %p474 = pneg %p473
      $region50: #{switch_feed_forward.3} parent=43 // pred_check_branch
        %476 = sbr.rel (%p474) target = $region52
      $region51: #{switch_feed_forward.3} parent=43 // pred_region
        %v477 = vld [vmem:[%s386] sm:$0xff]
        %v478 = vld [vmem:[%s386 + $0x8] sm:$0xff]
        %v479 = vld [vmem:[%s386 + $0x10] sm:$0xff]
        %v480 = vld [vmem:[%s386 + $0x18] sm:$0xff]
        %v481 = vld [vmem:[%s386 + $0x20] sm:$0xff]
        %v482 = vld [vmem:[%s386 + $0x28] sm:$0xff]
        %v483 = vld [vmem:[%s386 + $0x30] sm:$0xff]
        %v484 = vld [vmem:[%s386 + $0x38] sm:$0xff]
        %v485 = vld [vmem:[%s386 + $0x40] sm:$0xff]
        %v486 = vld [vmem:[%s386 + $0x48] sm:$0xff]
        %v487 = vld [vmem:[%s386 + $0x50] sm:$0xff]
        %v488 = vld [vmem:[%s386 + $0x58] sm:$0xff]
        %v489 = vld [vmem:[%s386 + $0x60] sm:$0xff]
        %v490 = vld [vmem:[%s386 + $0x68] sm:$0xff]
        %v491 = vld [vmem:[%s386 + $0x70] sm:$0xff]
        %v492 = vld [vmem:[%s386 + $0x78] sm:$0xff]
        %v493 = vld [vmem:[%s386 + $0x80] sm:$0xff]
        %v494 = vld [vmem:[%s386 + $0x88] sm:$0xff]
        %v495 = vld [vmem:[%s386 + $0x90] sm:$0xff]
        %v496 = vld [vmem:[%s386 + $0x98] sm:$0xff]
        %v497 = vld [vmem:[%s386 + $0xa0] sm:$0xff]
        %v498 = vld [vmem:[%s386 + $0xa8] sm:$0xff]
        %v499 = vld [vmem:[%s386 + $0xb0] sm:$0xff]
        %v500 = vld [vmem:[%s386 + $0xb8] sm:$0xff]
        %v501 = vld [vmem:[%s386 + $0xc0] sm:$0xff]
        %v502 = vld [vmem:[%s386 + $0xc8] sm:$0xff]
        %v503 = vld [vmem:[%s386 + $0xd0] sm:$0xff]
        %v504 = vld [vmem:[%s386 + $0xd8] sm:$0xff]
        %v505 = vld [vmem:[%s386 + $0xe0] sm:$0xff]
        %v506 = vld [vmem:[%s386 + $0xe8] sm:$0xff]
        %v507 = vld [vmem:[%s386 + $0xf0] sm:$0xff]
        %v508 = vld [vmem:[%s386 + $0xf8] sm:$0xff]
        %v509 = vld [vmem:[%s402] sm:$0xff]
        %v510 = vld [vmem:[%s402 + $0x8] sm:$0xff]
        %v511 = vld [vmem:[%s402 + $0x10] sm:$0xff]
        %v512 = vld [vmem:[%s402 + $0x18] sm:$0xff]
        %v513 = vld [vmem:[%s410] sm:$0x1]
        %v515 = vlaneseq
        %v516 = vshrl.u32 %v515, 7
        %v517 = vsub.s32 0, %v516
        %v518 = vrot.slane %v513, %v517
        %vm520 = vcmask 261120
        %v522 = vsel %vm520, %v477, 0
        %v525 = vsel %vm520, %v478, 0
        %v528 = vsel %vm520, %v479, 0
        %v531 = vsel %vm520, %v480, 0
        %v534 = vsel %vm520, %v481, 0
        %v537 = vsel %vm520, %v482, 0
        %v540 = vsel %vm520, %v483, 0
        %v543 = vsel %vm520, %v484, 0
        %v546 = vsel %vm520, %v485, 0
        %v549 = vsel %vm520, %v486, 0
        %v552 = vsel %vm520, %v487, 0
        %v555 = vsel %vm520, %v488, 0
        %v558 = vsel %vm520, %v489, 0
        %v561 = vsel %vm520, %v490, 0
        %v564 = vsel %vm520, %v491, 0
        %v567 = vsel %vm520, %v492, 0
        %v570 = vsel %vm520, %v493, 0
        %v573 = vsel %vm520, %v494, 0
        %v576 = vsel %vm520, %v495, 0
        %v579 = vsel %vm520, %v496, 0
        %v582 = vsel %vm520, %v497, 0
        %v585 = vsel %vm520, %v498, 0
        %v588 = vsel %vm520, %v499, 0
        %v591 = vsel %vm520, %v500, 0
        %v594 = vsel %vm520, %v501, 0
        %v597 = vsel %vm520, %v502, 0
        %v600 = vsel %vm520, %v503, 0
        %v603 = vsel %vm520, %v504, 0
        %v606 = vsel %vm520, %v505, 0
        %v609 = vsel %vm520, %v506, 0
        %v612 = vsel %vm520, %v507, 0
        %v615 = vsel %vm520, %v508, 0
        %617 = vmatprep.subr.mxu0 0.0
        %618 = vmatpush1.msra.mxu0 0.0
        %619 = vmatprep.subr.mxu0 0.0
        %620 = vmatpush1.msra.mxu0 0.0
        %621 = vmatprep.subr.mxu0 0.0
        %622 = vmatpush1.msra.mxu0 0.0
        %623 = vmatprep.subr.mxu0 0.0
        %624 = vmatpush1.msra.mxu0 0.0
        %625 = vmatprep.subr.mxu0 0.0
        %626 = vmatpush1.msra.mxu0 0.0
        %627 = vmatprep.subr.mxu0 0.0
        %628 = vmatpush1.msra.mxu0 0.0
        %629 = vmatprep.subr.mxu0 0.0
        %630 = vmatpush1.msra.mxu0 0.0
        %631 = vmatprep.subr.mxu0 0.0
        %632 = vmatpush1.msra.mxu0 0.0
        %633 = vmatprep.subr.mxu0 0.0
        %634 = vmatpush1.msra.mxu0 0.0
        %635 = vmatprep.subr.mxu0 0.0
        %636 = vmatpush1.msra.mxu0 0.0
        %637 = vmatprep.subr.mxu0 0.0
        %638 = vmatpush1.msra.mxu0 0.0
        %639 = vmatprep.subr.mxu0 0.0
        %640 = vmatpush1.msra.mxu0 0.0
        %641 = vmatprep.subr.mxu0 0.0
        %642 = vmatpush1.msra.mxu0 %v512
        %643 = vmatprep.subr.mxu0 0.0
        %644 = vmatpush1.msra.mxu0 %v511
        %645 = vmatprep.subr.mxu0 0.0
        %646 = vmatpush1.msra.mxu0 %v510
        %647 = vmatprep.subr.mxu0 0.0
        %648 = vmatpush1.msra.mxu0 %v509
        %649 = vmatprep.subr.mxu0 0.0
        %650 = vmatpush2.msra.mxu0 0.0
        %651 = vmatprep.subr.mxu0 0.0
        %652 = vmatpush2.msra.mxu0 0.0
        %653 = vmatprep.subr.mxu0 0.0
        %654 = vmatpush2.msra.mxu0 0.0
        %655 = vmatprep.subr.mxu0 0.0
        %656 = vmatpush2.msra.mxu0 0.0
        %657 = vmatprep.subr.mxu0 0.0
        %658 = vmatpush2.msra.mxu0 0.0
        %659 = vmatprep.subr.mxu0 0.0
        %660 = vmatpush2.msra.mxu0 0.0
        %661 = vmatprep.subr.mxu0 0.0
        %662 = vmatpush2.msra.mxu0 0.0
        %663 = vmatprep.subr.mxu0 0.0
        %664 = vmatpush2.msra.mxu0 0.0
        %665 = vmatprep.subr.mxu0 0.0
        %666 = vmatpush2.msra.mxu0 0.0
        %667 = vmatprep.subr.mxu0 0.0
        %668 = vmatpush2.msra.mxu0 0.0
        %669 = vmatprep.subr.mxu0 0.0
        %670 = vmatpush2.msra.mxu0 0.0
        %671 = vmatprep.subr.mxu0 0.0
        %672 = vmatpush2.msra.mxu0 0.0
        %673 = vmatprep.subr.mxu0 0.0
        %674 = vmatpush2.msra.mxu0 0.0
        %675 = vmatprep.subr.mxu0 0.0
        %676 = vmatpush2.msra.mxu0 0.0
        %677 = vmatprep.subr.mxu0 0.0
        %678 = vmatpush2.msra.mxu0 0.0
        %679 = vmatprep.subr.mxu0 0.0
        %680 = vmatpush2.msra.mxu0 0.0
        %681 = vmatprep.mubr.f32.mxu0 0.0
        %682 = vmatmul.mubr.f32.gmra.mxu0 %v522
        %v683 = vpop.f32.mrf.mxu0
        %v684 = vadd.f32 %v518, %v683
        %v685 = vpop.f32.mrf.mxu0
        %686 = vmatprep.mubr.f32.mxu0 0.0
        %687 = vmatmul.mubr.f32.gmra.mxu0 %v525
        %v688 = vpop.f32.mrf.mxu0
        %v689 = vadd.f32 %v518, %v688
        %v690 = vpop.f32.mrf.mxu0
        %691 = vmatprep.mubr.f32.mxu0 0.0
        %692 = vmatmul.mubr.f32.gmra.mxu0 %v528
        %v693 = vpop.f32.mrf.mxu0
        %v694 = vadd.f32 %v518, %v693
        %v695 = vpop.f32.mrf.mxu0
        %696 = vmatprep.mubr.f32.mxu0 0.0
        %697 = vmatmul.mubr.f32.gmra.mxu0 %v531
        %v698 = vpop.f32.mrf.mxu0
        %v699 = vadd.f32 %v518, %v698
        %v700 = vpop.f32.mrf.mxu0
        %701 = vmatprep.mubr.f32.mxu0 0.0
        %702 = vmatmul.mubr.f32.gmra.mxu0 %v534
        %v703 = vpop.f32.mrf.mxu0
        %v704 = vadd.f32 %v518, %v703
        %v705 = vpop.f32.mrf.mxu0
        %706 = vmatprep.mubr.f32.mxu0 0.0
        %707 = vmatmul.mubr.f32.gmra.mxu0 %v537
        %v708 = vpop.f32.mrf.mxu0
        %v709 = vadd.f32 %v518, %v708
        %v710 = vpop.f32.mrf.mxu0
        %711 = vmatprep.mubr.f32.mxu0 0.0
        %712 = vmatmul.mubr.f32.gmra.mxu0 %v540
        %v713 = vpop.f32.mrf.mxu0
        %v714 = vadd.f32 %v518, %v713
        %v715 = vpop.f32.mrf.mxu0
        %716 = vmatprep.mubr.f32.mxu0 0.0
        %717 = vmatmul.mubr.f32.gmra.mxu0 %v543
        %v718 = vpop.f32.mrf.mxu0
        %v719 = vadd.f32 %v518, %v718
        %v720 = vpop.f32.mrf.mxu0
        %721 = vmatprep.mubr.f32.mxu0 0.0
        %722 = vmatmul.mubr.f32.gmra.mxu0 %v546
        %v723 = vpop.f32.mrf.mxu0
        %v724 = vadd.f32 %v518, %v723
        %v725 = vpop.f32.mrf.mxu0
        %726 = vmatprep.mubr.f32.mxu0 0.0
        %727 = vmatmul.mubr.f32.gmra.mxu0 %v549
        %v728 = vpop.f32.mrf.mxu0
        %v729 = vadd.f32 %v518, %v728
        %v730 = vpop.f32.mrf.mxu0
        %731 = vmatprep.mubr.f32.mxu0 0.0
        %732 = vmatmul.mubr.f32.gmra.mxu0 %v552
        %v733 = vpop.f32.mrf.mxu0
        %v734 = vadd.f32 %v518, %v733
        %v735 = vpop.f32.mrf.mxu0
        %736 = vmatprep.mubr.f32.mxu0 0.0
        %737 = vmatmul.mubr.f32.gmra.mxu0 %v555
        %v738 = vpop.f32.mrf.mxu0
        %v739 = vadd.f32 %v518, %v738
        %v740 = vpop.f32.mrf.mxu0
        %741 = vmatprep.mubr.f32.mxu0 0.0
        %742 = vmatmul.mubr.f32.gmra.mxu0 %v558
        %v743 = vpop.f32.mrf.mxu0
        %v744 = vadd.f32 %v518, %v743
        %v745 = vpop.f32.mrf.mxu0
        %746 = vmatprep.mubr.f32.mxu0 0.0
        %747 = vmatmul.mubr.f32.gmra.mxu0 %v561
        %v748 = vpop.f32.mrf.mxu0
        %v749 = vadd.f32 %v518, %v748
        %v750 = vpop.f32.mrf.mxu0
        %751 = vmatprep.mubr.f32.mxu0 0.0
        %752 = vmatmul.mubr.f32.gmra.mxu0 %v564
        %v753 = vpop.f32.mrf.mxu0
        %v754 = vadd.f32 %v518, %v753
        %v755 = vpop.f32.mrf.mxu0
        %756 = vmatprep.mubr.f32.mxu0 0.0
        %757 = vmatmul.mubr.f32.gmra.mxu0 %v567
        %v758 = vpop.f32.mrf.mxu0
        %v759 = vadd.f32 %v518, %v758
        %v760 = vpop.f32.mrf.mxu0
        %761 = vmatprep.mubr.f32.mxu0 0.0
        %762 = vmatmul.mubr.f32.gmra.mxu0 %v570
        %v763 = vpop.f32.mrf.mxu0
        %v764 = vadd.f32 %v518, %v763
        %v765 = vpop.f32.mrf.mxu0
        %766 = vmatprep.mubr.f32.mxu0 0.0
        %767 = vmatmul.mubr.f32.gmra.mxu0 %v573
        %v768 = vpop.f32.mrf.mxu0
        %v769 = vadd.f32 %v518, %v768
        %v770 = vpop.f32.mrf.mxu0
        %771 = vmatprep.mubr.f32.mxu0 0.0
        %772 = vmatmul.mubr.f32.gmra.mxu0 %v576
        %v773 = vpop.f32.mrf.mxu0
        %v774 = vadd.f32 %v518, %v773
        %v775 = vpop.f32.mrf.mxu0
        %776 = vmatprep.mubr.f32.mxu0 0.0
        %777 = vmatmul.mubr.f32.gmra.mxu0 %v579
        %v778 = vpop.f32.mrf.mxu0
        %v779 = vadd.f32 %v518, %v778
        %v780 = vpop.f32.mrf.mxu0
        %781 = vmatprep.mubr.f32.mxu0 0.0
        %782 = vmatmul.mubr.f32.gmra.mxu0 %v582
        %v783 = vpop.f32.mrf.mxu0
        %v784 = vadd.f32 %v518, %v783
        %v785 = vpop.f32.mrf.mxu0
        %786 = vmatprep.mubr.f32.mxu0 0.0
        %787 = vmatmul.mubr.f32.gmra.mxu0 %v585
        %v788 = vpop.f32.mrf.mxu0
        %v789 = vadd.f32 %v518, %v788
        %v790 = vpop.f32.mrf.mxu0
        %791 = vmatprep.mubr.f32.mxu0 0.0
        %792 = vmatmul.mubr.f32.gmra.mxu0 %v588
        %v793 = vpop.f32.mrf.mxu0
        %v794 = vadd.f32 %v518, %v793
        %v795 = vpop.f32.mrf.mxu0
        %796 = vmatprep.mubr.f32.mxu0 0.0
        %797 = vmatmul.mubr.f32.gmra.mxu0 %v591
        %v798 = vpop.f32.mrf.mxu0
        %v799 = vadd.f32 %v518, %v798
        %v800 = vpop.f32.mrf.mxu0
        %801 = vmatprep.mubr.f32.mxu0 0.0
        %802 = vmatmul.mubr.f32.gmra.mxu0 %v594
        %v803 = vpop.f32.mrf.mxu0
        %v804 = vadd.f32 %v518, %v803
        %v805 = vpop.f32.mrf.mxu0
        %806 = vmatprep.mubr.f32.mxu0 0.0
        %807 = vmatmul.mubr.f32.gmra.mxu0 %v597
        %v808 = vpop.f32.mrf.mxu0
        %v809 = vadd.f32 %v518, %v808
        %v810 = vpop.f32.mrf.mxu0
        %811 = vmatprep.mubr.f32.mxu0 0.0
        %812 = vmatmul.mubr.f32.gmra.mxu0 %v600
        %v813 = vpop.f32.mrf.mxu0
        %v814 = vadd.f32 %v518, %v813
        %v815 = vpop.f32.mrf.mxu0
        %816 = vmatprep.mubr.f32.mxu0 0.0
        %817 = vmatmul.mubr.f32.gmra.mxu0 %v603
        %v818 = vpop.f32.mrf.mxu0
        %v819 = vadd.f32 %v518, %v818
        %v820 = vpop.f32.mrf.mxu0
        %821 = vmatprep.mubr.f32.mxu0 0.0
        %822 = vmatmul.mubr.f32.gmra.mxu0 %v606
        %v823 = vpop.f32.mrf.mxu0
        %v824 = vadd.f32 %v518, %v823
        %v825 = vpop.f32.mrf.mxu0
        %826 = vmatprep.mubr.f32.mxu0 0.0
        %827 = vmatmul.mubr.f32.gmra.mxu0 %v609
        %v828 = vpop.f32.mrf.mxu0
        %v829 = vadd.f32 %v518, %v828
        %v830 = vpop.f32.mrf.mxu0
        %831 = vmatprep.mubr.f32.mxu0 0.0
        %832 = vmatmul.mubr.f32.gmra.mxu0 %v612
        %v833 = vpop.f32.mrf.mxu0
        %v834 = vadd.f32 %v518, %v833
        %v835 = vpop.f32.mrf.mxu0
        %836 = vmatprep.mubr.f32.mxu0 0.0
        %837 = vmatmul.mubr.f32.gmra.mxu0 %v615
        %v838 = vpop.f32.mrf.mxu0
        %v839 = vadd.f32 %v518, %v838
        %v840 = vpop.f32.mrf.mxu0
        %841 = vdwg.mxu0
        %v842 = vmax.f32 %v684, 0.0
        %v843 = vmax.f32 %v689, 0.0
        %v844 = vmax.f32 %v694, 0.0
        %v845 = vmax.f32 %v699, 0.0
        %v846 = vmax.f32 %v704, 0.0
        %v847 = vmax.f32 %v709, 0.0
        %v848 = vmax.f32 %v714, 0.0
        %v849 = vmax.f32 %v719, 0.0
        %v850 = vmax.f32 %v724, 0.0
        %v851 = vmax.f32 %v729, 0.0
        %v852 = vmax.f32 %v734, 0.0
        %v853 = vmax.f32 %v739, 0.0
        %v854 = vmax.f32 %v744, 0.0
        %v855 = vmax.f32 %v749, 0.0
        %v856 = vmax.f32 %v754, 0.0
        %v857 = vmax.f32 %v759, 0.0
        %v858 = vmax.f32 %v764, 0.0
        %v859 = vmax.f32 %v769, 0.0
        %v860 = vmax.f32 %v774, 0.0
        %v861 = vmax.f32 %v779, 0.0
        %v862 = vmax.f32 %v784, 0.0
        %v863 = vmax.f32 %v789, 0.0
        %v864 = vmax.f32 %v794, 0.0
        %v865 = vmax.f32 %v799, 0.0
        %v866 = vmax.f32 %v804, 0.0
        %v867 = vmax.f32 %v809, 0.0
        %v868 = vmax.f32 %v814, 0.0
        %v869 = vmax.f32 %v819, 0.0
        %v870 = vmax.f32 %v824, 0.0
        %v871 = vmax.f32 %v829, 0.0
        %v872 = vmax.f32 %v834, 0.0
        %v873 = vmax.f32 %v839, 0.0
        %v874 = vld [vmem:[#allocation2] sm:$0xff]
        %v875 = vld [vmem:[#allocation2 + $0x8] sm:$0xff]
        %v876 = vld [vmem:[#allocation2 + $0x10] sm:$0xff]
        %v877 = vld [vmem:[#allocation2 + $0x18] sm:$0xff]
        %v878 = vld [vmem:[#allocation2 + $0x20] sm:$0xff]
        %v879 = vld [vmem:[#allocation2 + $0x28] sm:$0xff]
        %v880 = vld [vmem:[#allocation2 + $0x30] sm:$0xff]
        %v881 = vld [vmem:[#allocation2 + $0x38] sm:$0xff]
        %v882 = vld [vmem:[#allocation2 + $0x40] sm:$0xff]
        %v883 = vld [vmem:[#allocation2 + $0x48] sm:$0xff]
        %v884 = vld [vmem:[#allocation2 + $0x50] sm:$0xff]
        %v885 = vld [vmem:[#allocation2 + $0x58] sm:$0xff]
        %v886 = vld [vmem:[#allocation2 + $0x60] sm:$0xff]
        %v887 = vld [vmem:[#allocation2 + $0x68] sm:$0xff]
        %v888 = vld [vmem:[#allocation2 + $0x70] sm:$0xff]
        %v889 = vld [vmem:[#allocation2 + $0x78] sm:$0xff]
        %v890 = vld [vmem:[#allocation2 + $0x80] sm:$0xff]
        %v891 = vld [vmem:[#allocation2 + $0x88] sm:$0xff]
        %v892 = vld [vmem:[#allocation2 + $0x90] sm:$0xff]
        %v893 = vld [vmem:[#allocation2 + $0x98] sm:$0xff]
        %v894 = vld [vmem:[#allocation2 + $0xa0] sm:$0xff]
        %v895 = vld [vmem:[#allocation2 + $0xa8] sm:$0xff]
        %v896 = vld [vmem:[#allocation2 + $0xb0] sm:$0xff]
        %v897 = vld [vmem:[#allocation2 + $0xb8] sm:$0xff]
        %v898 = vld [vmem:[#allocation2 + $0xc0] sm:$0xff]
        %v899 = vld [vmem:[#allocation2 + $0xc8] sm:$0xff]
        %v900 = vld [vmem:[#allocation2 + $0xd0] sm:$0xff]
        %v901 = vld [vmem:[#allocation2 + $0xd8] sm:$0xff]
        %v902 = vld [vmem:[#allocation2 + $0xe0] sm:$0xff]
        %v903 = vld [vmem:[#allocation2 + $0xe8] sm:$0xff]
        %v904 = vld [vmem:[#allocation2 + $0xf0] sm:$0xff]
        %v905 = vld [vmem:[#allocation2 + $0xf8] sm:$0xff]
        %v906 = vld [vmem:[%s421] sm:$0xff]
        %v907 = vld [vmem:[%s421 + $0x8] sm:$0xff]
        %v908 = vld [vmem:[%s421 + $0x10] sm:$0xff]
        %v909 = vld [vmem:[%s421 + $0x18] sm:$0xff]
        %v910 = vld [vmem:[%s421 + $0x20] sm:$0xff]
        %v911 = vld [vmem:[%s421 + $0x28] sm:$0xff]
        %v912 = vld [vmem:[%s421 + $0x30] sm:$0xff]
        %v913 = vld [vmem:[%s421 + $0x38] sm:$0xff]
        %vm914 = vcmask 523264
        %v916 = vsel %vm914, %v842, 0
        %v919 = vsel %vm914, %v843, 0
        %v922 = vsel %vm914, %v844, 0
        %v925 = vsel %vm914, %v845, 0
        %v928 = vsel %vm914, %v846, 0
        %v931 = vsel %vm914, %v847, 0
        %v934 = vsel %vm914, %v848, 0
        %v937 = vsel %vm914, %v849, 0
        %v940 = vsel %vm914, %v850, 0
        %v943 = vsel %vm914, %v851, 0
        %v946 = vsel %vm914, %v852, 0
        %v949 = vsel %vm914, %v853, 0
        %v952 = vsel %vm914, %v854, 0
        %v955 = vsel %vm914, %v855, 0
        %v958 = vsel %vm914, %v856, 0
        %v961 = vsel %vm914, %v857, 0
        %v964 = vsel %vm914, %v858, 0
        %v967 = vsel %vm914, %v859, 0
        %v970 = vsel %vm914, %v860, 0
        %v973 = vsel %vm914, %v861, 0
        %v976 = vsel %vm914, %v862, 0
        %v979 = vsel %vm914, %v863, 0
        %v982 = vsel %vm914, %v864, 0
        %v985 = vsel %vm914, %v865, 0
        %v988 = vsel %vm914, %v866, 0
        %v991 = vsel %vm914, %v867, 0
        %v994 = vsel %vm914, %v868, 0
        %v997 = vsel %vm914, %v869, 0
        %v1000 = vsel %vm914, %v870, 0
        %v1003 = vsel %vm914, %v871, 0
        %v1006 = vsel %vm914, %v872, 0
        %v1009 = vsel %vm914, %v873, 0
        %1011 = vmatprep.subr.mxu0 0.0
        %1012 = vmatpush1.msra.mxu0 0.0
        %1013 = vmatprep.subr.mxu0 0.0
        %1014 = vmatpush1.msra.mxu0 0.0
        %1015 = vmatprep.subr.mxu0 0.0
        %1016 = vmatpush1.msra.mxu0 0.0
        %1017 = vmatprep.subr.mxu0 0.0
        %1018 = vmatpush1.msra.mxu0 0.0
        %1019 = vmatprep.subr.mxu0 0.0
        %1020 = vmatpush1.msra.mxu0 0.0
        %1021 = vmatprep.subr.mxu0 0.0
        %1022 = vmatpush1.msra.mxu0 0.0
        %1023 = vmatprep.subr.mxu0 0.0
        %1024 = vmatpush1.msra.mxu0 0.0
        %1025 = vmatprep.subr.mxu0 0.0
        %1026 = vmatpush1.msra.mxu0 0.0
        %1027 = vmatprep.subr.mxu0 0.0
        %1028 = vmatpush1.msra.mxu0 %v913
        %1029 = vmatprep.subr.mxu0 0.0
        %1030 = vmatpush1.msra.mxu0 %v912
        %1031 = vmatprep.subr.mxu0 0.0
        %1032 = vmatpush1.msra.mxu0 %v911
        %1033 = vmatprep.subr.mxu0 0.0
        %1034 = vmatpush1.msra.mxu0 %v910
        %1035 = vmatprep.subr.mxu0 0.0
        %1036 = vmatpush1.msra.mxu0 %v909
        %1037 = vmatprep.subr.mxu0 0.0
        %1038 = vmatpush1.msra.mxu0 %v908
        %1039 = vmatprep.subr.mxu0 0.0
        %1040 = vmatpush1.msra.mxu0 %v907
        %1041 = vmatprep.subr.mxu0 0.0
        %1042 = vmatpush1.msra.mxu0 %v906
        %1043 = vmatprep.subr.mxu0 0.0
        %1044 = vmatpush2.msra.mxu0 0.0
        %1045 = vmatprep.subr.mxu0 0.0
        %1046 = vmatpush2.msra.mxu0 0.0
        %1047 = vmatprep.subr.mxu0 0.0
        %1048 = vmatpush2.msra.mxu0 0.0
        %1049 = vmatprep.subr.mxu0 0.0
        %1050 = vmatpush2.msra.mxu0 0.0
        %1051 = vmatprep.subr.mxu0 0.0
        %1052 = vmatpush2.msra.mxu0 0.0
        %1053 = vmatprep.subr.mxu0 0.0
        %1054 = vmatpush2.msra.mxu0 0.0
        %1055 = vmatprep.subr.mxu0 0.0
        %1056 = vmatpush2.msra.mxu0 0.0
        %1057 = vmatprep.subr.mxu0 0.0
        %1058 = vmatpush2.msra.mxu0 0.0
        %1059 = vmatprep.subr.mxu0 0.0
        %1060 = vmatpush2.msra.mxu0 0.0
        %1061 = vmatprep.subr.mxu0 0.0
        %1062 = vmatpush2.msra.mxu0 0.0
        %1063 = vmatprep.subr.mxu0 0.0
        %1064 = vmatpush2.msra.mxu0 0.0
        %1065 = vmatprep.subr.mxu0 0.0
        %1066 = vmatpush2.msra.mxu0 0.0
        %1067 = vmatprep.subr.mxu0 0.0
        %1068 = vmatpush2.msra.mxu0 0.0
        %1069 = vmatprep.subr.mxu0 0.0
        %1070 = vmatpush2.msra.mxu0 0.0
        %1071 = vmatprep.subr.mxu0 0.0
        %1072 = vmatpush2.msra.mxu0 0.0
        %1073 = vmatprep.subr.mxu0 0.0
        %1074 = vmatpush2.msra.mxu0 0.0
        %1075 = vmatprep.mubr.f32.mxu0 0.0
        %1076 = vmatmul.mubr.f32.gmra.mxu0 %v916
        %v1077 = vpop.f32.mrf.mxu0
        %v1078 = vadd.f32 0.0, %v1077
        %v1079 = vpop.f32.mrf.mxu0
        %1080 = vmatprep.mubr.f32.mxu0 0.0
        %1081 = vmatmul.mubr.f32.gmra.mxu0 %v919
        %v1082 = vpop.f32.mrf.mxu0
        %v1083 = vadd.f32 0.0, %v1082
        %v1084 = vpop.f32.mrf.mxu0
        %1085 = vmatprep.mubr.f32.mxu0 0.0
        %1086 = vmatmul.mubr.f32.gmra.mxu0 %v922
        %v1087 = vpop.f32.mrf.mxu0
        %v1088 = vadd.f32 0.0, %v1087
        %v1089 = vpop.f32.mrf.mxu0
        %1090 = vmatprep.mubr.f32.mxu0 0.0
        %1091 = vmatmul.mubr.f32.gmra.mxu0 %v925
        %v1092 = vpop.f32.mrf.mxu0
        %v1093 = vadd.f32 0.0, %v1092
        %v1094 = vpop.f32.mrf.mxu0
        %1095 = vmatprep.mubr.f32.mxu0 0.0
        %1096 = vmatmul.mubr.f32.gmra.mxu0 %v928
        %v1097 = vpop.f32.mrf.mxu0
        %v1098 = vadd.f32 0.0, %v1097
        %v1099 = vpop.f32.mrf.mxu0
        %1100 = vmatprep.mubr.f32.mxu0 0.0
        %1101 = vmatmul.mubr.f32.gmra.mxu0 %v931
        %v1102 = vpop.f32.mrf.mxu0
        %v1103 = vadd.f32 0.0, %v1102
        %v1104 = vpop.f32.mrf.mxu0
        %1105 = vmatprep.mubr.f32.mxu0 0.0
        %1106 = vmatmul.mubr.f32.gmra.mxu0 %v934
        %v1107 = vpop.f32.mrf.mxu0
        %v1108 = vadd.f32 0.0, %v1107
        %v1109 = vpop.f32.mrf.mxu0
        %1110 = vmatprep.mubr.f32.mxu0 0.0
        %1111 = vmatmul.mubr.f32.gmra.mxu0 %v937
        %v1112 = vpop.f32.mrf.mxu0
        %v1113 = vadd.f32 0.0, %v1112
        %v1114 = vpop.f32.mrf.mxu0
        %1115 = vmatprep.mubr.f32.mxu0 0.0
        %1116 = vmatmul.mubr.f32.gmra.mxu0 %v940
        %v1117 = vpop.f32.mrf.mxu0
        %v1118 = vadd.f32 0.0, %v1117
        %v1119 = vpop.f32.mrf.mxu0
        %1120 = vmatprep.mubr.f32.mxu0 0.0
        %1121 = vmatmul.mubr.f32.gmra.mxu0 %v943
        %v1122 = vpop.f32.mrf.mxu0
        %v1123 = vadd.f32 0.0, %v1122
        %v1124 = vpop.f32.mrf.mxu0
        %1125 = vmatprep.mubr.f32.mxu0 0.0
        %1126 = vmatmul.mubr.f32.gmra.mxu0 %v946
        %v1127 = vpop.f32.mrf.mxu0
        %v1128 = vadd.f32 0.0, %v1127
        %v1129 = vpop.f32.mrf.mxu0
        %1130 = vmatprep.mubr.f32.mxu0 0.0
        %1131 = vmatmul.mubr.f32.gmra.mxu0 %v949
        %v1132 = vpop.f32.mrf.mxu0
        %v1133 = vadd.f32 0.0, %v1132
        %v1134 = vpop.f32.mrf.mxu0
        %1135 = vmatprep.mubr.f32.mxu0 0.0
        %1136 = vmatmul.mubr.f32.gmra.mxu0 %v952
        %v1137 = vpop.f32.mrf.mxu0
        %v1138 = vadd.f32 0.0, %v1137
        %v1139 = vpop.f32.mrf.mxu0
        %1140 = vmatprep.mubr.f32.mxu0 0.0
        %1141 = vmatmul.mubr.f32.gmra.mxu0 %v955
        %v1142 = vpop.f32.mrf.mxu0
        %v1143 = vadd.f32 0.0, %v1142
        %v1144 = vpop.f32.mrf.mxu0
        %1145 = vmatprep.mubr.f32.mxu0 0.0
        %1146 = vmatmul.mubr.f32.gmra.mxu0 %v958
        %v1147 = vpop.f32.mrf.mxu0
        %v1148 = vadd.f32 0.0, %v1147
        %v1149 = vpop.f32.mrf.mxu0
        %1150 = vmatprep.mubr.f32.mxu0 0.0
        %1151 = vmatmul.mubr.f32.gmra.mxu0 %v961
        %v1152 = vpop.f32.mrf.mxu0
        %v1153 = vadd.f32 0.0, %v1152
        %v1154 = vpop.f32.mrf.mxu0
        %1155 = vmatprep.mubr.f32.mxu0 0.0
        %1156 = vmatmul.mubr.f32.gmra.mxu0 %v964
        %v1157 = vpop.f32.mrf.mxu0
        %v1158 = vadd.f32 0.0, %v1157
        %v1159 = vpop.f32.mrf.mxu0
        %1160 = vmatprep.mubr.f32.mxu0 0.0
        %1161 = vmatmul.mubr.f32.gmra.mxu0 %v967
        %v1162 = vpop.f32.mrf.mxu0
        %v1163 = vadd.f32 0.0, %v1162
        %v1164 = vpop.f32.mrf.mxu0
        %1165 = vmatprep.mubr.f32.mxu0 0.0
        %1166 = vmatmul.mubr.f32.gmra.mxu0 %v970
        %v1167 = vpop.f32.mrf.mxu0
        %v1168 = vadd.f32 0.0, %v1167
        %v1169 = vpop.f32.mrf.mxu0
        %1170 = vmatprep.mubr.f32.mxu0 0.0
        %1171 = vmatmul.mubr.f32.gmra.mxu0 %v973
        %v1172 = vpop.f32.mrf.mxu0
        %v1173 = vadd.f32 0.0, %v1172
        %v1174 = vpop.f32.mrf.mxu0
        %1175 = vmatprep.mubr.f32.mxu0 0.0
        %1176 = vmatmul.mubr.f32.gmra.mxu0 %v976
        %v1177 = vpop.f32.mrf.mxu0
        %v1178 = vadd.f32 0.0, %v1177
        %v1179 = vpop.f32.mrf.mxu0
        %1180 = vmatprep.mubr.f32.mxu0 0.0
        %1181 = vmatmul.mubr.f32.gmra.mxu0 %v979
        %v1182 = vpop.f32.mrf.mxu0
        %v1183 = vadd.f32 0.0, %v1182
        %v1184 = vpop.f32.mrf.mxu0
        %1185 = vmatprep.mubr.f32.mxu0 0.0
        %1186 = vmatmul.mubr.f32.gmra.mxu0 %v982
        %v1187 = vpop.f32.mrf.mxu0
        %v1188 = vadd.f32 0.0, %v1187
        %v1189 = vpop.f32.mrf.mxu0
        %1190 = vmatprep.mubr.f32.mxu0 0.0
        %1191 = vmatmul.mubr.f32.gmra.mxu0 %v985
        %v1192 = vpop.f32.mrf.mxu0
        %v1193 = vadd.f32 0.0, %v1192
        %v1194 = vpop.f32.mrf.mxu0
        %1195 = vmatprep.mubr.f32.mxu0 0.0
        %1196 = vmatmul.mubr.f32.gmra.mxu0 %v988
        %v1197 = vpop.f32.mrf.mxu0
        %v1198 = vadd.f32 0.0, %v1197
        %v1199 = vpop.f32.mrf.mxu0
        %1200 = vmatprep.mubr.f32.mxu0 0.0
        %1201 = vmatmul.mubr.f32.gmra.mxu0 %v991
        %v1202 = vpop.f32.mrf.mxu0
        %v1203 = vadd.f32 0.0, %v1202
        %v1204 = vpop.f32.mrf.mxu0
        %1205 = vmatprep.mubr.f32.mxu0 0.0
        %1206 = vmatmul.mubr.f32.gmra.mxu0 %v994
        %v1207 = vpop.f32.mrf.mxu0
        %v1208 = vadd.f32 0.0, %v1207
        %v1209 = vpop.f32.mrf.mxu0
        %1210 = vmatprep.mubr.f32.mxu0 0.0
        %1211 = vmatmul.mubr.f32.gmra.mxu0 %v997
        %v1212 = vpop.f32.mrf.mxu0
        %v1213 = vadd.f32 0.0, %v1212
        %v1214 = vpop.f32.mrf.mxu0
        %1215 = vmatprep.mubr.f32.mxu0 0.0
        %1216 = vmatmul.mubr.f32.gmra.mxu0 %v1000
        %v1217 = vpop.f32.mrf.mxu0
        %v1218 = vadd.f32 0.0, %v1217
        %v1219 = vpop.f32.mrf.mxu0
        %1220 = vmatprep.mubr.f32.mxu0 0.0
        %1221 = vmatmul.mubr.f32.gmra.mxu0 %v1003
        %v1222 = vpop.f32.mrf.mxu0
        %v1223 = vadd.f32 0.0, %v1222
        %v1224 = vpop.f32.mrf.mxu0
        %1225 = vmatprep.mubr.f32.mxu0 0.0
        %1226 = vmatmul.mubr.f32.gmra.mxu0 %v1006
        %v1227 = vpop.f32.mrf.mxu0
        %v1228 = vadd.f32 0.0, %v1227
        %v1229 = vpop.f32.mrf.mxu0
        %1230 = vmatprep.mubr.f32.mxu0 0.0
        %1231 = vmatmul.mubr.f32.gmra.mxu0 %v1009
        %v1232 = vpop.f32.mrf.mxu0
        %v1233 = vadd.f32 0.0, %v1232
        %v1234 = vpop.f32.mrf.mxu0
        %1235 = vdwg.mxu0
        %v1236 = vadd.f32 %v874, %v1078
        %v1237 = vadd.f32 %v875, %v1083
        %v1238 = vadd.f32 %v876, %v1088
        %v1239 = vadd.f32 %v877, %v1093
        %v1240 = vadd.f32 %v878, %v1098
        %v1241 = vadd.f32 %v879, %v1103
        %v1242 = vadd.f32 %v880, %v1108
        %v1243 = vadd.f32 %v881, %v1113
        %v1244 = vadd.f32 %v882, %v1118
        %v1245 = vadd.f32 %v883, %v1123
        %v1246 = vadd.f32 %v884, %v1128
        %v1247 = vadd.f32 %v885, %v1133
        %v1248 = vadd.f32 %v886, %v1138
        %v1249 = vadd.f32 %v887, %v1143
        %v1250 = vadd.f32 %v888, %v1148
        %v1251 = vadd.f32 %v889, %v1153
        %v1252 = vadd.f32 %v890, %v1158
        %v1253 = vadd.f32 %v891, %v1163
        %v1254 = vadd.f32 %v892, %v1168
        %v1255 = vadd.f32 %v893, %v1173
        %v1256 = vadd.f32 %v894, %v1178
        %v1257 = vadd.f32 %v895, %v1183
        %v1258 = vadd.f32 %v896, %v1188
        %v1259 = vadd.f32 %v897, %v1193
        %v1260 = vadd.f32 %v898, %v1198
        %v1261 = vadd.f32 %v899, %v1203
        %v1262 = vadd.f32 %v900, %v1208
        %v1263 = vadd.f32 %v901, %v1213
        %v1264 = vadd.f32 %v902, %v1218
        %v1265 = vadd.f32 %v903, %v1223
        %v1266 = vadd.f32 %v904, %v1228
        %v1267 = vadd.f32 %v905, %v1233
        %1268 = vst.msk [vmem:[#allocation2] sm:$0xff] %vm520, %v1236
        %1269 = vst.msk [vmem:[#allocation2 + $0x8] sm:$0xff] %vm520, %v1237
        %1270 = vst.msk [vmem:[#allocation2 + $0x10] sm:$0xff] %vm520, %v1238
        %1271 = vst.msk [vmem:[#allocation2 + $0x18] sm:$0xff] %vm520, %v1239
        %1272 = vst.msk [vmem:[#allocation2 + $0x20] sm:$0xff] %vm520, %v1240
        %1273 = vst.msk [vmem:[#allocation2 + $0x28] sm:$0xff] %vm520, %v1241
        %1274 = vst.msk [vmem:[#allocation2 + $0x30] sm:$0xff] %vm520, %v1242
        %1275 = vst.msk [vmem:[#allocation2 + $0x38] sm:$0xff] %vm520, %v1243
        %1276 = vst.msk [vmem:[#allocation2 + $0x40] sm:$0xff] %vm520, %v1244
        %1277 = vst.msk [vmem:[#allocation2 + $0x48] sm:$0xff] %vm520, %v1245
        %1278 = vst.msk [vmem:[#allocation2 + $0x50] sm:$0xff] %vm520, %v1246
        %1279 = vst.msk [vmem:[#allocation2 + $0x58] sm:$0xff] %vm520, %v1247
        %1280 = vst.msk [vmem:[#allocation2 + $0x60] sm:$0xff] %vm520, %v1248
        %1281 = vst.msk [vmem:[#allocation2 + $0x68] sm:$0xff] %vm520, %v1249
        %1282 = vst.msk [vmem:[#allocation2 + $0x70] sm:$0xff] %vm520, %v1250
        %1283 = vst.msk [vmem:[#allocation2 + $0x78] sm:$0xff] %vm520, %v1251
        %1284 = vst.msk [vmem:[#allocation2 + $0x80] sm:$0xff] %vm520, %v1252
        %1285 = vst.msk [vmem:[#allocation2 + $0x88] sm:$0xff] %vm520, %v1253
        %1286 = vst.msk [vmem:[#allocation2 + $0x90] sm:$0xff] %vm520, %v1254
        %1287 = vst.msk [vmem:[#allocation2 + $0x98] sm:$0xff] %vm520, %v1255
        %1288 = vst.msk [vmem:[#allocation2 + $0xa0] sm:$0xff] %vm520, %v1256
        %1289 = vst.msk [vmem:[#allocation2 + $0xa8] sm:$0xff] %vm520, %v1257
        %1290 = vst.msk [vmem:[#allocation2 + $0xb0] sm:$0xff] %vm520, %v1258
        %1291 = vst.msk [vmem:[#allocation2 + $0xb8] sm:$0xff] %vm520, %v1259
        %1292 = vst.msk [vmem:[#allocation2 + $0xc0] sm:$0xff] %vm520, %v1260
        %1293 = vst.msk [vmem:[#allocation2 + $0xc8] sm:$0xff] %vm520, %v1261
        %1294 = vst.msk [vmem:[#allocation2 + $0xd0] sm:$0xff] %vm520, %v1262
        %1295 = vst.msk [vmem:[#allocation2 + $0xd8] sm:$0xff] %vm520, %v1263
        %1296 = vst.msk [vmem:[#allocation2 + $0xe0] sm:$0xff] %vm520, %v1264
        %1297 = vst.msk [vmem:[#allocation2 + $0xe8] sm:$0xff] %vm520, %v1265
        %1298 = vst.msk [vmem:[#allocation2 + $0xf0] sm:$0xff] %vm520, %v1266
        %1299 = vst.msk [vmem:[#allocation2 + $0xf8] sm:$0xff] %vm520, %v1267
      $region52: #{switch_feed_forward.3} parent=43 // pred_fallthru
        _
      // Predicated region
      $region53: #{switch_feed_forward.3} parent=43 // pred_check
        %p1300 = pneg %p435
      $region54: #{switch_feed_forward.3} parent=43 // pred_check_branch
        %1302 = sbr.rel (%p1300) target = $region56
      $region55: #{switch_feed_forward.3} parent=43 // pred_region
        %v1303 = vld [vmem:[#allocation2] sm:$0xff]
        %v1304 = vld [vmem:[#allocation2 + $0x8] sm:$0xff]
        %v1305 = vld [vmem:[#allocation2 + $0x10] sm:$0xff]
        %v1306 = vld [vmem:[#allocation2 + $0x18] sm:$0xff]
        %v1307 = vld [vmem:[#allocation2 + $0x20] sm:$0xff]
        %v1308 = vld [vmem:[#allocation2 + $0x28] sm:$0xff]
        %v1309 = vld [vmem:[#allocation2 + $0x30] sm:$0xff]
        %v1310 = vld [vmem:[#allocation2 + $0x38] sm:$0xff]
        %v1311 = vld [vmem:[#allocation2 + $0x40] sm:$0xff]
        %v1312 = vld [vmem:[#allocation2 + $0x48] sm:$0xff]
        %v1313 = vld [vmem:[#allocation2 + $0x50] sm:$0xff]
        %v1314 = vld [vmem:[#allocation2 + $0x58] sm:$0xff]
        %v1315 = vld [vmem:[#allocation2 + $0x60] sm:$0xff]
        %v1316 = vld [vmem:[#allocation2 + $0x68] sm:$0xff]
        %v1317 = vld [vmem:[#allocation2 + $0x70] sm:$0xff]
        %v1318 = vld [vmem:[#allocation2 + $0x78] sm:$0xff]
        %v1319 = vld [vmem:[#allocation2 + $0x80] sm:$0xff]
        %v1320 = vld [vmem:[#allocation2 + $0x88] sm:$0xff]
        %v1321 = vld [vmem:[#allocation2 + $0x90] sm:$0xff]
        %v1322 = vld [vmem:[#allocation2 + $0x98] sm:$0xff]
        %v1323 = vld [vmem:[#allocation2 + $0xa0] sm:$0xff]
        %v1324 = vld [vmem:[#allocation2 + $0xa8] sm:$0xff]
        %v1325 = vld [vmem:[#allocation2 + $0xb0] sm:$0xff]
        %v1326 = vld [vmem:[#allocation2 + $0xb8] sm:$0xff]
        %v1327 = vld [vmem:[#allocation2 + $0xc0] sm:$0xff]
        %v1328 = vld [vmem:[#allocation2 + $0xc8] sm:$0xff]
        %v1329 = vld [vmem:[#allocation2 + $0xd0] sm:$0xff]
        %v1330 = vld [vmem:[#allocation2 + $0xd8] sm:$0xff]
        %v1331 = vld [vmem:[#allocation2 + $0xe0] sm:$0xff]
        %v1332 = vld [vmem:[#allocation2 + $0xe8] sm:$0xff]
        %v1333 = vld [vmem:[#allocation2 + $0xf0] sm:$0xff]
        %v1334 = vld [vmem:[#allocation2 + $0xf8] sm:$0xff]
        %v1335 = vld [vmem:[%s427] sm:$0x1]
        %v1337 = vlaneseq
        %v1338 = vshrl.u32 %v1337, 7
        %v1339 = vsub.s32 0, %v1338
        %v1340 = vrot.slane %v1335, %v1339
        %v1342 = vadd.f32 %v1303, %v1340
        %v1343 = vadd.f32 %v1304, %v1340
        %v1344 = vadd.f32 %v1305, %v1340
        %v1345 = vadd.f32 %v1306, %v1340
        %v1346 = vadd.f32 %v1307, %v1340
        %v1347 = vadd.f32 %v1308, %v1340
        %v1348 = vadd.f32 %v1309, %v1340
        %v1349 = vadd.f32 %v1310, %v1340
        %v1350 = vadd.f32 %v1311, %v1340
        %v1351 = vadd.f32 %v1312, %v1340
        %v1352 = vadd.f32 %v1313, %v1340
        %v1353 = vadd.f32 %v1314, %v1340
        %v1354 = vadd.f32 %v1315, %v1340
        %v1355 = vadd.f32 %v1316, %v1340
        %v1356 = vadd.f32 %v1317, %v1340
        %v1357 = vadd.f32 %v1318, %v1340
        %v1358 = vadd.f32 %v1319, %v1340
        %v1359 = vadd.f32 %v1320, %v1340
        %v1360 = vadd.f32 %v1321, %v1340
        %v1361 = vadd.f32 %v1322, %v1340
        %v1362 = vadd.f32 %v1323, %v1340
        %v1363 = vadd.f32 %v1324, %v1340
        %v1364 = vadd.f32 %v1325, %v1340
        %v1365 = vadd.f32 %v1326, %v1340
        %v1366 = vadd.f32 %v1327, %v1340
        %v1367 = vadd.f32 %v1328, %v1340
        %v1368 = vadd.f32 %v1329, %v1340
        %v1369 = vadd.f32 %v1330, %v1340
        %v1370 = vadd.f32 %v1331, %v1340
        %v1371 = vadd.f32 %v1332, %v1340
        %v1372 = vadd.f32 %v1333, %v1340
        %v1373 = vadd.f32 %v1334, %v1340
        %v1374 = vld [vmem:[%s392] sm:$0xff]
        %v1375 = vld [vmem:[%s392 + $0x8] sm:$0xff]
        %v1376 = vld [vmem:[%s392 + $0x10] sm:$0xff]
        %v1377 = vld [vmem:[%s392 + $0x18] sm:$0xff]
        %v1378 = vld [vmem:[%s392 + $0x20] sm:$0xff]
        %v1379 = vld [vmem:[%s392 + $0x28] sm:$0xff]
        %v1380 = vld [vmem:[%s392 + $0x30] sm:$0xff]
        %v1381 = vld [vmem:[%s392 + $0x38] sm:$0xff]
        %v1382 = vld [vmem:[%s392 + $0x40] sm:$0xff]
        %v1383 = vld [vmem:[%s392 + $0x48] sm:$0xff]
        %v1384 = vld [vmem:[%s392 + $0x50] sm:$0xff]
        %v1385 = vld [vmem:[%s392 + $0x58] sm:$0xff]
        %v1386 = vld [vmem:[%s392 + $0x60] sm:$0xff]
        %v1387 = vld [vmem:[%s392 + $0x68] sm:$0xff]
        %v1388 = vld [vmem:[%s392 + $0x70] sm:$0xff]
        %v1389 = vld [vmem:[%s392 + $0x78] sm:$0xff]
        %v1390 = vld [vmem:[%s392 + $0x80] sm:$0xff]
        %v1391 = vld [vmem:[%s392 + $0x88] sm:$0xff]
        %v1392 = vld [vmem:[%s392 + $0x90] sm:$0xff]
        %v1393 = vld [vmem:[%s392 + $0x98] sm:$0xff]
        %v1394 = vld [vmem:[%s392 + $0xa0] sm:$0xff]
        %v1395 = vld [vmem:[%s392 + $0xa8] sm:$0xff]
        %v1396 = vld [vmem:[%s392 + $0xb0] sm:$0xff]
        %v1397 = vld [vmem:[%s392 + $0xb8] sm:$0xff]
        %v1398 = vld [vmem:[%s392 + $0xc0] sm:$0xff]
        %v1399 = vld [vmem:[%s392 + $0xc8] sm:$0xff]
        %v1400 = vld [vmem:[%s392 + $0xd0] sm:$0xff]
        %v1401 = vld [vmem:[%s392 + $0xd8] sm:$0xff]
        %v1402 = vld [vmem:[%s392 + $0xe0] sm:$0xff]
        %v1403 = vld [vmem:[%s392 + $0xe8] sm:$0xff]
        %v1404 = vld [vmem:[%s392 + $0xf0] sm:$0xff]
        %v1405 = vld [vmem:[%s392 + $0xf8] sm:$0xff]
        %1407 = vset.pattern.permute.xlu0 0
        %1408 = vperm.xlu0 %1407, %v1374
        %v1409 = vpop.permute.xlu0 %1408
        %1412 = vset.pattern.permute.xlu0 0
        %1413 = vperm.xlu0 %1412, %v1375
        %v1414 = vpop.permute.xlu0 %1413
        %1417 = vset.pattern.permute.xlu0 0
        %1418 = vperm.xlu0 %1417, %v1376
        %v1419 = vpop.permute.xlu0 %1418
        %1422 = vset.pattern.permute.xlu0 0
        %1423 = vperm.xlu0 %1422, %v1377
        %v1424 = vpop.permute.xlu0 %1423
        %1427 = vset.pattern.permute.xlu0 0
        %1428 = vperm.xlu0 %1427, %v1378
        %v1429 = vpop.permute.xlu0 %1428
        %1432 = vset.pattern.permute.xlu0 0
        %1433 = vperm.xlu0 %1432, %v1379
        %v1434 = vpop.permute.xlu0 %1433
        %1437 = vset.pattern.permute.xlu0 0
        %1438 = vperm.xlu0 %1437, %v1380
        %v1439 = vpop.permute.xlu0 %1438
        %1442 = vset.pattern.permute.xlu0 0
        %1443 = vperm.xlu0 %1442, %v1381
        %v1444 = vpop.permute.xlu0 %1443
        %1447 = vset.pattern.permute.xlu0 0
        %1448 = vperm.xlu0 %1447, %v1382
        %v1449 = vpop.permute.xlu0 %1448
        %1452 = vset.pattern.permute.xlu0 0
        %1453 = vperm.xlu0 %1452, %v1383
        %v1454 = vpop.permute.xlu0 %1453
        %1457 = vset.pattern.permute.xlu0 0
        %1458 = vperm.xlu0 %1457, %v1384
        %v1459 = vpop.permute.xlu0 %1458
        %1462 = vset.pattern.permute.xlu0 0
        %1463 = vperm.xlu0 %1462, %v1385
        %v1464 = vpop.permute.xlu0 %1463
        %1467 = vset.pattern.permute.xlu0 0
        %1468 = vperm.xlu0 %1467, %v1386
        %v1469 = vpop.permute.xlu0 %1468
        %1472 = vset.pattern.permute.xlu0 0
        %1473 = vperm.xlu0 %1472, %v1387
        %v1474 = vpop.permute.xlu0 %1473
        %1477 = vset.pattern.permute.xlu0 0
        %1478 = vperm.xlu0 %1477, %v1388
        %v1479 = vpop.permute.xlu0 %1478
        %1482 = vset.pattern.permute.xlu0 0
        %1483 = vperm.xlu0 %1482, %v1389
        %v1484 = vpop.permute.xlu0 %1483
        %1487 = vset.pattern.permute.xlu0 0
        %1488 = vperm.xlu0 %1487, %v1390
        %v1489 = vpop.permute.xlu0 %1488
        %1492 = vset.pattern.permute.xlu0 0
        %1493 = vperm.xlu0 %1492, %v1391
        %v1494 = vpop.permute.xlu0 %1493
        %1497 = vset.pattern.permute.xlu0 0
        %1498 = vperm.xlu0 %1497, %v1392
        %v1499 = vpop.permute.xlu0 %1498
        %1502 = vset.pattern.permute.xlu0 0
        %1503 = vperm.xlu0 %1502, %v1393
        %v1504 = vpop.permute.xlu0 %1503
        %1507 = vset.pattern.permute.xlu0 0
        %1508 = vperm.xlu0 %1507, %v1394
        %v1509 = vpop.permute.xlu0 %1508
        %1512 = vset.pattern.permute.xlu0 0
        %1513 = vperm.xlu0 %1512, %v1395
        %v1514 = vpop.permute.xlu0 %1513
        %1517 = vset.pattern.permute.xlu0 0
        %1518 = vperm.xlu0 %1517, %v1396
        %v1519 = vpop.permute.xlu0 %1518
        %1522 = vset.pattern.permute.xlu0 0
        %1523 = vperm.xlu0 %1522, %v1397
        %v1524 = vpop.permute.xlu0 %1523
        %1527 = vset.pattern.permute.xlu0 0
        %1528 = vperm.xlu0 %1527, %v1398
        %v1529 = vpop.permute.xlu0 %1528
        %1532 = vset.pattern.permute.xlu0 0
        %1533 = vperm.xlu0 %1532, %v1399
        %v1534 = vpop.permute.xlu0 %1533
        %1537 = vset.pattern.permute.xlu0 0
        %1538 = vperm.xlu0 %1537, %v1400
        %v1539 = vpop.permute.xlu0 %1538
        %1542 = vset.pattern.permute.xlu0 0
        %1543 = vperm.xlu0 %1542, %v1401
        %v1544 = vpop.permute.xlu0 %1543
        %1547 = vset.pattern.permute.xlu0 0
        %1548 = vperm.xlu0 %1547, %v1402
        %v1549 = vpop.permute.xlu0 %1548
        %1552 = vset.pattern.permute.xlu0 0
        %1553 = vperm.xlu0 %1552, %v1403
        %v1554 = vpop.permute.xlu0 %1553
        %1557 = vset.pattern.permute.xlu0 0
        %1558 = vperm.xlu0 %1557, %v1404
        %v1559 = vpop.permute.xlu0 %1558
        %1562 = vset.pattern.permute.xlu0 0
        %1563 = vperm.xlu0 %1562, %v1405
        %v1564 = vpop.permute.xlu0 %1563
        %v1566 = vmul.f32 %v1342, %v1409
        %v1567 = vmul.f32 %v1343, %v1414
        %v1568 = vmul.f32 %v1344, %v1419
        %v1569 = vmul.f32 %v1345, %v1424
        %v1570 = vmul.f32 %v1346, %v1429
        %v1571 = vmul.f32 %v1347, %v1434
        %v1572 = vmul.f32 %v1348, %v1439
        %v1573 = vmul.f32 %v1349, %v1444
        %v1574 = vmul.f32 %v1350, %v1449
        %v1575 = vmul.f32 %v1351, %v1454
        %v1576 = vmul.f32 %v1352, %v1459
        %v1577 = vmul.f32 %v1353, %v1464
        %v1578 = vmul.f32 %v1354, %v1469
        %v1579 = vmul.f32 %v1355, %v1474
        %v1580 = vmul.f32 %v1356, %v1479
        %v1581 = vmul.f32 %v1357, %v1484
        %v1582 = vmul.f32 %v1358, %v1489
        %v1583 = vmul.f32 %v1359, %v1494
        %v1584 = vmul.f32 %v1360, %v1499
        %v1585 = vmul.f32 %v1361, %v1504
        %v1586 = vmul.f32 %v1362, %v1509
        %v1587 = vmul.f32 %v1363, %v1514
        %v1588 = vmul.f32 %v1364, %v1519
        %v1589 = vmul.f32 %v1365, %v1524
        %v1590 = vmul.f32 %v1366, %v1529
        %v1591 = vmul.f32 %v1367, %v1534
        %v1592 = vmul.f32 %v1368, %v1539
        %v1593 = vmul.f32 %v1369, %v1544
        %v1594 = vmul.f32 %v1370, %v1549
        %v1595 = vmul.f32 %v1371, %v1554
        %v1596 = vmul.f32 %v1372, %v1559
        %v1597 = vmul.f32 %v1373, %v1564
        %vm1598 = vcmask 261120
        %1599 = vst.msk [vmem:[%s433] sm:$0xff] %vm1598, %v1566
        %1600 = vst.msk [vmem:[%s433 + $0x8] sm:$0xff] %vm1598, %v1567
        %1601 = vst.msk [vmem:[%s433 + $0x10] sm:$0xff] %vm1598, %v1568
        %1602 = vst.msk [vmem:[%s433 + $0x18] sm:$0xff] %vm1598, %v1569
        %1603 = vst.msk [vmem:[%s433 + $0x20] sm:$0xff] %vm1598, %v1570
        %1604 = vst.msk [vmem:[%s433 + $0x28] sm:$0xff] %vm1598, %v1571
        %1605 = vst.msk [vmem:[%s433 + $0x30] sm:$0xff] %vm1598, %v1572
        %1606 = vst.msk [vmem:[%s433 + $0x38] sm:$0xff] %vm1598, %v1573
        %1607 = vst.msk [vmem:[%s433 + $0x40] sm:$0xff] %vm1598, %v1574
        %1608 = vst.msk [vmem:[%s433 + $0x48] sm:$0xff] %vm1598, %v1575
        %1609 = vst.msk [vmem:[%s433 + $0x50] sm:$0xff] %vm1598, %v1576
        %1610 = vst.msk [vmem:[%s433 + $0x58] sm:$0xff] %vm1598, %v1577
        %1611 = vst.msk [vmem:[%s433 + $0x60] sm:$0xff] %vm1598, %v1578
        %1612 = vst.msk [vmem:[%s433 + $0x68] sm:$0xff] %vm1598, %v1579
        %1613 = vst.msk [vmem:[%s433 + $0x70] sm:$0xff] %vm1598, %v1580
        %1614 = vst.msk [vmem:[%s433 + $0x78] sm:$0xff] %vm1598, %v1581
        %1615 = vst.msk [vmem:[%s433 + $0x80] sm:$0xff] %vm1598, %v1582
        %1616 = vst.msk [vmem:[%s433 + $0x88] sm:$0xff] %vm1598, %v1583
        %1617 = vst.msk [vmem:[%s433 + $0x90] sm:$0xff] %vm1598, %v1584
        %1618 = vst.msk [vmem:[%s433 + $0x98] sm:$0xff] %vm1598, %v1585
        %1619 = vst.msk [vmem:[%s433 + $0xa0] sm:$0xff] %vm1598, %v1586
        %1620 = vst.msk [vmem:[%s433 + $0xa8] sm:$0xff] %vm1598, %v1587
        %1621 = vst.msk [vmem:[%s433 + $0xb0] sm:$0xff] %vm1598, %v1588
        %1622 = vst.msk [vmem:[%s433 + $0xb8] sm:$0xff] %vm1598, %v1589
        %1623 = vst.msk [vmem:[%s433 + $0xc0] sm:$0xff] %vm1598, %v1590
        %1624 = vst.msk [vmem:[%s433 + $0xc8] sm:$0xff] %vm1598, %v1591
        %1625 = vst.msk [vmem:[%s433 + $0xd0] sm:$0xff] %vm1598, %v1592
        %1626 = vst.msk [vmem:[%s433 + $0xd8] sm:$0xff] %vm1598, %v1593
        %1627 = vst.msk [vmem:[%s433 + $0xe0] sm:$0xff] %vm1598, %v1594
        %1628 = vst.msk [vmem:[%s433 + $0xe8] sm:$0xff] %vm1598, %v1595
        %1629 = vst.msk [vmem:[%s433 + $0xf0] sm:$0xff] %vm1598, %v1596
        %1630 = vst.msk [vmem:[%s433 + $0xf8] sm:$0xff] %vm1598, %v1597
      $region56: #{switch_feed_forward.3} parent=43 // pred_fallthru
        _
      %s1631 = smul.u32 32, %s33
      %p1632 = scmp.lt.s32.totalorder %s1631, 159
      %s1633 = scalar_select %p1632, %s1631, 159
      %s1634 = smul.addr %s1633, 8
      %s1635 = scalar_lea.vmem %s8, %s1634
      // Predicated region
      $region57: #{switch_feed_forward.3} parent=43 // pred_check
        %p1636 = pneg %p229
      $region58: #{switch_feed_forward.3} parent=43 // pred_check_branch
        %1638 = sbr.rel (%p1636) target = $region60
      $region59: #{switch_feed_forward.3} parent=43 // pred_region
        %s1639 = smul.u32 32, %s33
      $region60: #{switch_feed_forward.3} parent=43 // pred_fallthru
        _
    $region44: #{switch_feed_forward.3} parent=5 // pred_fallthru
      _
    %p1640 = scmp.le.s32.totalorder 2, %s24
    // Predicated region
    $region61: #{switch_feed_forward.3} parent=5 // pred_check
      %p1641 = pneg %p1640
    $region62: #{switch_feed_forward.3} parent=5 // pred_check_branch
      %1643 = sbr.rel (%p1641) target = $region64
    $region63: #{switch_feed_forward.3} parent=5 // pred_region
      %s1644 = ssub.s32 %s24, 2
      // Predicated region
      $region65: #{switch_feed_forward.3} parent=63 // pred_check
        %p1645 = pneg %p235
      $region66: #{switch_feed_forward.3} parent=63 // pred_check_branch
        %1647 = sbr.rel (%p1645) target = $region68
      $region67: #{switch_feed_forward.3} parent=63 // pred_region
        %s1648 = smul.u32 32, %s35
        %p1649 = scmp.lt.s32.totalorder %s1648, 159
        %s1650 = scalar_select %p1649, %s1648, 159
        %s1651 = smul.addr %s1650, 8
        %s1652 = scalar_lea.vmem %s8, %s1651
      $region68: #{switch_feed_forward.3} parent=63 // pred_fallthru
        _
    $region64: #{switch_feed_forward.3} parent=5 // pred_fallthru
      _
  $region6: #{switch_feed_forward.3} parent=0 // loop_footer
    %s28 = sadd.s32 1, %s24
  $region7: #{switch_feed_forward.3} parent=0 // loop_footer_branch
    %23 = sbr.rel target = $region3
  $region8: #{switch_feed_forward.3} parent=0 // loop_exit
    _

</llo_original>
